<compile_context>
chip_gen: v7x
topology: tpu7x:2x2x1
jax: 0.10.0
libtpu: 0.0.40
codegen_flags: <defaults>
</compile_context>

<pallas_src>
import jax
import jax.numpy as jnp
from jax.experimental import pallas as pl
from jax.experimental.pallas import tpu as pltpu


def repconv_kernel(x_ref, xprev_ref, xnext_ref, w1_ref, dw_ref, w2_ref,
                   shift_ref, maskl_ref, maskr_ref, o_ref, ypad_ref):
    # x_ref:     (1, TH*W, C)    flattened input tile (rows = image rows * W)
    # xprev_ref: (1, W, C)       image row just above the tile (clamped)
    # xnext_ref: (1, W, C)       image row just below the tile (clamped)
    # w1_ref:    (C, Cp)         1x1 weight^T with BN1 scale folded (Cp%128==0)
    # dw_ref:    (9, Cp)         depthwise 3x3 taps, row = 3*kh + kw (f32)
    # w2_ref:    (Cp, Cout)      1x1 weight^T with BN2 scale folded
    # shift_ref: (1, Cout)       fully folded output bias (f32)
    # maskl/maskr: (TH*W, 1)     1.0 where a (w-1)/(w+1) neighbour exists
    # o_ref:     (1, TH*W, Cout)
    # ypad_ref:  VMEM ((TH+2)*W, Cp) scratch: H-padded 1x1 output
    rows = x_ref.shape[1]          # TH * W
    W = xprev_ref.shape[1]
    i = pl.program_id(1)
    last = pl.num_programs(1) - 1

    cdt = w1_ref.dtype             # MXU operand dtype (f32, or bf16 for big C)
    w1 = w1_ref[...]

    # --- 1x1 conv (BN1 scale folded); intermediate is lane-dense (Cp) ------
    y_main = jnp.dot(x_ref[0].astype(cdt), w1,
                     preferred_element_type=jnp.float32)          # (rows, Cp)

    # Single-row halos above/below this tile, zeroed at the true image border
    # (exact: the BN pad value is already folded into shift_ref).
    keep_top = (i > 0).astype(jnp.float32)
    keep_bot = (i < last).astype(jnp.float32)
    y_prev = jnp.dot(xprev_ref[0].astype(cdt), w1,
                     preferred_element_type=jnp.float32) * keep_top
    y_next = jnp.dot(xnext_ref[0].astype(cdt), w1,
                     preferred_element_type=jnp.float32) * keep_bot

    # H-padded intermediate in VMEM.  All offsets are static multiples of 8
    # (W is sublane-aligned) -> aligned, unmasked stores.  The centre tap is
    # fed straight from registers, so the scratch is only read twice.
    sdt = ypad_ref.dtype
    ypad_ref[pl.ds(0, W)] = y_prev.astype(sdt)
    ypad_ref[pl.ds(W, rows)] = y_main.astype(sdt)
    ypad_ref[pl.ds(W + rows, W)] = y_next.astype(sdt)

    r0 = ypad_ref[pl.ds(0, rows)].astype(jnp.float32)       # image row h-1
    r1 = y_main                                              # image row h
    r2 = ypad_ref[pl.ds(2 * W, rows)].astype(jnp.float32)    # image row h+1

    # --- depthwise 3x3 (f32 VPU math): hoist the row taps, then ONE roll +
    # ONE mask per W-shift instead of one per kh --------------------------
    sL = r0 * dw_ref[0] + r1 * dw_ref[3] + r2 * dw_ref[6]
    sC = r0 * dw_ref[1] + r1 * dw_ref[4] + r2 * dw_ref[7]
    sR = r0 * dw_ref[2] + r1 * dw_ref[5] + r2 * dw_ref[8]
    acc = (maskl_ref[...] * pltpu.roll(sL, 1, axis=0)
           + sC
           + maskr_ref[...] * pltpu.roll(sR, rows - 1, axis=0))

    # --- 1x1 conv Cp -> Cout (BN2 scale folded) + fully folded bias --------
    z = jnp.dot(acc.astype(cdt), w2_ref[...],
                preferred_element_type=jnp.float32) + shift_ref[...]
    o_ref[0] = z.astype(o_ref.dtype)


def repconv_pallas(x_nhwc, w1, bn1, dw, w2, bn2, eps=1e-5, tile_h=None,
                   out_dtype=None):
    """x_nhwc: (N,H,W,C).  w1: (C,C); dw: (C,3,3); w2: (Cout,C).
    bn1 = (gamma, beta, mean, var) over C; bn2 same over Cout.  Eval-mode BN."""
    N, H, W, C = x_nhwc.shape
    Cout = w2.shape[0]
    if out_dtype is None:
        out_dtype = x_nhwc.dtype

    g1, b1, m1, v1 = bn1
    g2, b2, m2, v2 = bn2
    inv1 = g1 / jnp.sqrt(v1 + eps)
    inv2 = g2 / jnp.sqrt(v2 + eps)
    shift1 = b1 - m1 * inv1          # == BNAndPadLayer pad value
    shift2 = b2 - m2 * inv2

    # Fold BN scales into the 1x1 weights; fold BN1 shift + pad semantics +
    # BN2 shift into a single per-output-channel bias.
    w1_eff = w1.T * inv1[None, :]                        # (C, C)
    w2_eff = w2.T * inv2[None, :]                        # (C, Cout)
    dw_sum = jnp.sum(dw, axis=(1, 2))                    # (C,)
    shift_final = shift2 + (shift1 * dw_sum) @ w2_eff    # (Cout,)

    # Lane-dense *intermediate* only: pad the (tiny) weights to Cp; x and the
    # output keep their real channel counts -> no Cp/C HBM blow-up, no slice.
    Cp = ((C + 127) // 128) * 128
    w1p = jnp.pad(w1_eff, ((0, 0), (0, Cp - C)))                       # (C, Cp)
    w2p = jnp.pad(w2_eff, ((0, Cp - C), (0, 0)))                       # (Cp, Cout)
    dwp = jnp.pad(jnp.transpose(dw, (1, 2, 0)).reshape(9, C),
                  ((0, 0), (0, Cp - C))).astype(jnp.float32)           # (9, Cp)
    shiftp = shift_final.reshape(1, Cout).astype(jnp.float32)

    # bf16 MXU operands (f32 accumulation) once channels are big enough for
    # the matmuls to matter; tiny C stays f32 (precision, negligible MXU time).
    use_bf16 = C >= 256
    cdt = jnp.bfloat16 if use_bf16 else jnp.float32
    w1p = w1p.astype(cdt)
    w2p = w2p.astype(cdt)
    sdt = jnp.bfloat16 if use_bf16 else jnp.float32      # scratch dtype

    # Sublane-aligned width (padded zero columns reproduce the zero-pad border
    # exactly, extra output columns are dropped).  Flatten H,W -> one row axis
    # so the kernel needs no in-kernel reshapes (row-major, free in XLA).
    Wp = ((W + 7) // 8) * 8
    x_p = x_nhwc if Wp == W else jnp.pad(
        x_nhwc, ((0, 0), (0, 0), (0, Wp - W), (0, 0)))
    x_flat = x_p.reshape(N, H * Wp, C)

    # --- generation-aware H-tile selection ---------------------------------
    try:
        vmem_cap = int(pltpu.get_tpu_info().vmem_capacity_bytes)
    except Exception:
        vmem_cap = 64 * 1024 * 1024                      # assume v7x (smallest)
    budget = int(0.55 * vmem_cap)

    in_isz = x_nhwc.dtype.itemsize
    sc_isz = 2 if use_bf16 else 4
    out_isz = 2 if out_dtype in (jnp.bfloat16, jnp.float16) else 4

    def vmem_est(th):
        r = th * Wp
        tile_in = r * C * in_isz
        halo = Wp * C * in_isz
        tile_out = r * Cout * out_isz
        scratch = (th + 2) * Wp * Cp * sc_isz
        temps = 7 * r * Cp * 4                            # live f32 temporaries
        weights = 2 * ((C * Cp + Cp * Cout) * sc_isz + 9 * Cp * 4
                       + Cout * 4 + 2 * r * 4)
        return 2 * (tile_in + 2 * halo + tile_out) + scratch + temps + weights

    divisors = [d for d in range(1, H + 1) if H % d == 0]
    th_cap = H
    if N == 1 and len(divisors) > 1:
        # keep >= 2 grid steps so both v7x TensorCores get work
        th_cap = max(d for d in divisors if d < H)
    if tile_h is not None:
        th_cap = min(th_cap, tile_h)
    TH = 1
    for d in divisors:
        if d <= th_cap and vmem_est(d) <= budget:
            TH = max(TH, d)
    # TODO(synk): a prime H degrades to TH=1 (correct but slow); a ragged last
    # tile would fix that.
    nH = H // TH
    rows = TH * Wp
    vmem_limit = int(min(max(2 * vmem_est(TH), 32 * 1024 * 1024),
                         int(0.9 * vmem_cap)))

    # Column-border masks, computed once on host (hoisted out of the kernel).
    wpos = jnp.arange(rows, dtype=jnp.int32) % Wp
    maskl = (wpos > 0).astype(jnp.float32).reshape(rows, 1)
    maskr = (wpos < Wp - 1).astype(jnp.float32).reshape(rows, 1)

    out_flat = pl.pallas_call(
        repconv_kernel,
        out_shape=jax.ShapeDtypeStruct((N, H * Wp, Cout), out_dtype),
        grid_spec=pltpu.PrefetchScalarGridSpec(
            num_scalar_prefetch=0,
            grid=(N, nH),
            in_specs=[
                pl.BlockSpec((1, rows, C), lambda n, i: (n, i, 0)),
                pl.BlockSpec((1, Wp, C),
                             lambda n, i: (n, jnp.maximum(i * TH - 1, 0), 0)),
                pl.BlockSpec((1, Wp, C),
                             lambda n, i: (n, jnp.minimum(i * TH + TH, H - 1), 0)),
                pl.BlockSpec((C, Cp), lambda n, i: (0, 0)),
                pl.BlockSpec((9, Cp), lambda n, i: (0, 0)),
                pl.BlockSpec((Cp, Cout), lambda n, i: (0, 0)),
                pl.BlockSpec((1, Cout), lambda n, i: (0, 0)),
                pl.BlockSpec((rows, 1), lambda n, i: (0, 0)),
                pl.BlockSpec((rows, 1), lambda n, i: (0, 0)),
            ],
            out_specs=pl.BlockSpec((1, rows, Cout), lambda n, i: (n, i, 0)),
            scratch_shapes=[pltpu.VMEM(((TH + 2) * Wp, Cp), sdt)],
        ),
        compiler_params=pltpu.CompilerParams(
            dimension_semantics=("parallel", "parallel"),
            vmem_limit_bytes=vmem_limit),
    )(x_flat, x_flat, x_flat, w1p, dwp, w2p, shiftp, maskl, maskr)

    out = out_flat.reshape(N, H, Wp, Cout)
    if Wp != W:
        out = out[:, :, :W, :]
    return out


def repconv_reference(x_nhwc, w1, bn1, dw, w2, bn2, eps=1e-5):
    """Pure-JAX reference mirroring the PyTorch module (eval-mode BN)."""
    N, H, W, C = x_nhwc.shape
    g1, b1, m1, v1 = bn1
    g2, b2, m2, v2 = bn2

    # 1x1 conv
    y = jnp.einsum('nhwi,oi->nhwo', x_nhwc, w1)
    # BN1
    inv1 = g1 / jnp.sqrt(v1 + eps)
    y = y * inv1 + (b1 - m1 * inv1)
    # pad with pad_values = BN1(0)
    pad_vals = b1 - m1 * g1 / jnp.sqrt(v1 + eps)
    yp = jnp.pad(y, ((0, 0), (1, 1), (1, 1), (0, 0)))
    yp = yp.at[:, 0, :, :].set(pad_vals)
    yp = yp.at[:, -1, :, :].set(pad_vals)
    yp = yp.at[:, :, 0, :].set(pad_vals)
    yp = yp.at[:, :, -1, :].set(pad_vals)
    # depthwise 3x3 valid
    acc = jnp.zeros((N, H, W, C), jnp.float32)
    for kh in range(3):
        for kw in range(3):
            acc = acc + yp[:, kh:kh + H, kw:kw + W, :] * dw[:, kh, kw]
    # 1x1 conv C -> Cout
    z = jnp.einsum('nhwi,oi->nhwo', acc, w2)
    # BN2
    inv2 = g2 / jnp.sqrt(v2 + eps)
    z = z * inv2 + (b2 - m2 * inv2)
    return z


if __name__ == "__main__":
    N, C, H, W = 2, 4, 16, 16
    Cout = 8

    key = jax.random.PRNGKey(0)
    keys = jax.random.split(key, 12)

    # Input in PyTorch NCHW convention, converted to NHWC for the kernel.
    x_nchw = jax.random.normal(keys[0], (N, C, H, W), jnp.float32)
    x_nhwc = jnp.transpose(x_nchw, (0, 2, 3, 1))

    # conv1x1 (C -> C), PyTorch weight (C, C, 1, 1) -> (C, C)
    w1 = jax.random.normal(keys[1], (C, C), jnp.float32) * 0.2
    # BN1 params / running stats (eval mode)
    bn1 = (
        1.0 + 0.1 * jax.random.normal(keys[2], (C,), jnp.float32),   # gamma
        0.1 * jax.random.normal(keys[3], (C,), jnp.float32),         # beta
        0.1 * jax.random.normal(keys[4], (C,), jnp.float32),         # running_mean
        0.5 + jax.random.uniform(keys[5], (C,), jnp.float32),        # running_var
    )
    # depthwise 3x3, PyTorch weight (C, 1, 3, 3) -> (C, 3, 3)
    dw = jax.random.normal(keys[6], (C, 3, 3), jnp.float32) * 0.2
    # conv1x1 (C -> Cout), PyTorch weight (Cout, C, 1, 1) -> (Cout, C)
    w2 = jax.random.normal(keys[7], (Cout, C), jnp.float32) * 0.2
    # BN2 params / running stats
    bn2 = (
        1.0 + 0.1 * jax.random.normal(keys[8], (Cout,), jnp.float32),
        0.1 * jax.random.normal(keys[9], (Cout,), jnp.float32),
        0.1 * jax.random.normal(keys[10], (Cout,), jnp.float32),
        0.5 + jax.random.uniform(keys[11], (Cout,), jnp.float32),
    )

    out = repconv_pallas(x_nhwc, w1, bn1, dw, w2, bn2)
    out = jax.block_until_ready(out)

    ref = repconv_reference(x_nhwc, w1, bn1, dw, w2, bn2)
    assert out.shape == (N, H, W, Cout)
    assert jnp.allclose(out, ref, atol=1e-4, rtol=1e-4), (
        float(jnp.max(jnp.abs(out - ref))))

    print("KERNEL_OK")
</pallas_src>

<mosaic_0001>
module attributes {stable_mosaic.version = 11 : i64} {
  func.func @repconv_kernel(%arg0: i32, %arg1: i32, %arg2: memref<1x256x4xf32, #tpu.memory_space<vmem>>, %arg3: memref<1x16x4xf32, #tpu.memory_space<vmem>>, %arg4: memref<1x16x4xf32, #tpu.memory_space<vmem>>, %arg5: memref<4x128xf32, #tpu.memory_space<vmem>>, %arg6: memref<9x128xf32, #tpu.memory_space<vmem>>, %arg7: memref<128x8xf32, #tpu.memory_space<vmem>>, %arg8: memref<1x8xf32, #tpu.memory_space<vmem>>, %arg9: memref<256x1xf32, #tpu.memory_space<vmem>>, %arg10: memref<256x1xf32, #tpu.memory_space<vmem>>, %arg11: memref<1x256x8xf32, #tpu.memory_space<vmem>>, %arg12: memref<288x128xf32, #tpu.memory_space<vmem>>) attributes {dimension_semantics = [#tpu.dimension_semantics<parallel>, #tpu.dimension_semantics<parallel>], iteration_bounds = array<i64: 2, 1>, scalar_prefetch = 0 : i64, scratch_operands = 1 : i64, tpu.core_type = #tpu.core_type<tc>, window_params = [{transform_indices = @transform_0, window_bounds = array<i64: 1, 256, 4>}, {transform_indices = @transform_1, window_bounds = array<i64: 1, 16, 4>}, {transform_indices = @transform_2, window_bounds = array<i64: 1, 16, 4>}, {pipeline_mode = #tpu.pipeline_mode<synchronous>, transform_indices = @transform_3, window_bounds = array<i64: 4, 128>}, {pipeline_mode = #tpu.pipeline_mode<synchronous>, transform_indices = @transform_4, window_bounds = array<i64: 9, 128>}, {pipeline_mode = #tpu.pipeline_mode<synchronous>, transform_indices = @transform_5, window_bounds = array<i64: 128, 8>}, {pipeline_mode = #tpu.pipeline_mode<synchronous>, transform_indices = @transform_6, window_bounds = array<i64: 1, 8>}, {pipeline_mode = #tpu.pipeline_mode<synchronous>, transform_indices = @transform_7, window_bounds = array<i64: 256, 1>}, {pipeline_mode = #tpu.pipeline_mode<synchronous>, transform_indices = @transform_8, window_bounds = array<i64: 256, 1>}, {transform_indices = @transform_9, window_bounds = array<i64: 1, 256, 8>}]} {
    %c0 = arith.constant 0 : index
    %c0_0 = arith.constant 0 : index
    %0 = vector.load %arg5[%c0, %c0_0] : memref<4x128xf32, #tpu.memory_space<vmem>>, vector<4x128xf32>
    %c0_1 = arith.constant 0 : index
    %c0_2 = arith.constant 0 : index
    %c0_3 = arith.constant 0 : index
    %1 = vector.load %arg2[%c0_1, %c0_2, %c0_3] : memref<1x256x4xf32, #tpu.memory_space<vmem>>, vector<1x256x4xf32>
    %2 = vector.shape_cast %1 : vector<1x256x4xf32> to vector<256x4xf32>
    %cst = arith.constant dense<0.000000e+00> : vector<256x128xf32>
    %3 = tpu.matmul %2, %0, %cst {dimension_numbers = #tpu.dot_dimension_numbers<[1], [0], [0], [1], [0, 0, 1, 1], [], []>} : vector<256x4xf32>, vector<4x128xf32>, vector<256x128xf32> -> vector<256x128xf32>
    %c0_i32 = arith.constant 0 : i32
    %4 = arith.cmpi sgt, %arg1, %c0_i32 : i32
    %5 = arith.extui %4 : i1 to i32
    %6 = arith.sitofp %5 : i32 to f32
    %c0_i32_4 = arith.constant 0 : i32
    %7 = arith.cmpi slt, %arg1, %c0_i32_4 : i32
    %8 = arith.extui %7 : i1 to i32
    %9 = arith.sitofp %8 : i32 to f32
    %c0_5 = arith.constant 0 : index
    %c0_6 = arith.constant 0 : index
    %c0_7 = arith.constant 0 : index
    %10 = vector.load %arg3[%c0_5, %c0_6, %c0_7] : memref<1x16x4xf32, #tpu.memory_space<vmem>>, vector<1x16x4xf32>
    %11 = vector.shape_cast %10 : vector<1x16x4xf32> to vector<16x4xf32>
    %cst_8 = arith.constant dense<0.000000e+00> : vector<16x128xf32>
    %12 = tpu.matmul %11, %0, %cst_8 {dimension_numbers = #tpu.dot_dimension_numbers<[1], [0], [0], [1], [0, 0, 1, 1], [], []>} : vector<16x4xf32>, vector<4x128xf32>, vector<16x128xf32> -> vector<16x128xf32>
    %13 = vector.broadcast %6 : f32 to vector<16x128xf32>
    %14 = arith.mulf %12, %13 : vector<16x128xf32>
    %c0_9 = arith.constant 0 : index
    %c0_10 = arith.constant 0 : index
    %c0_11 = arith.constant 0 : index
    %15 = vector.load %arg4[%c0_9, %c0_10, %c0_11] : memref<1x16x4xf32, #tpu.memory_space<vmem>>, vector<1x16x4xf32>
    %16 = vector.shape_cast %15 : vector<1x16x4xf32> to vector<16x4xf32>
    %cst_12 = arith.constant dense<0.000000e+00> : vector<16x128xf32>
    %17 = tpu.matmul %16, %0, %cst_12 {dimension_numbers = #tpu.dot_dimension_numbers<[1], [0], [0], [1], [0, 0, 1, 1], [], []>} : vector<16x4xf32>, vector<4x128xf32>, vector<16x128xf32> -> vector<16x128xf32>
    %18 = vector.broadcast %9 : f32 to vector<16x128xf32>
    %19 = arith.mulf %17, %18 : vector<16x128xf32>
    %c0_13 = arith.constant 0 : index
    %c0_14 = arith.constant 0 : index
    %20 = vector.load %arg12[%c0_13, %c0_14] : memref<288x128xf32, #tpu.memory_space<vmem>>, vector<16x128xf32>
    tpu.vector_store %arg12[%c0_13, %c0_14], %14 {strides = array<i32>} : memref<288x128xf32, #tpu.memory_space<vmem>>, vector<16x128xf32>,
    %c16 = arith.constant 16 : index
    %c0_15 = arith.constant 0 : index
    %21 = vector.load %arg12[%c16, %c0_15] : memref<288x128xf32, #tpu.memory_space<vmem>>, vector<256x128xf32>
    tpu.vector_store %arg12[%c16, %c0_15], %3 {strides = array<i32>} : memref<288x128xf32, #tpu.memory_space<vmem>>, vector<256x128xf32>,
    %c272 = arith.constant 272 : index
    %c0_16 = arith.constant 0 : index
    %22 = vector.load %arg12[%c272, %c0_16] : memref<288x128xf32, #tpu.memory_space<vmem>>, vector<16x128xf32>
    tpu.vector_store %arg12[%c272, %c0_16], %19 {strides = array<i32>} : memref<288x128xf32, #tpu.memory_space<vmem>>, vector<16x128xf32>,
    %c0_17 = arith.constant 0 : index
    %c0_18 = arith.constant 0 : index
    %23 = vector.load %arg12[%c0_17, %c0_18] : memref<288x128xf32, #tpu.memory_space<vmem>>, vector<256x128xf32>
    %c32 = arith.constant 32 : index
    %c0_19 = arith.constant 0 : index
    %24 = vector.load %arg12[%c32, %c0_19] : memref<288x128xf32, #tpu.memory_space<vmem>>, vector<256x128xf32>
    %c0_20 = arith.constant 0 : index
    %c0_21 = arith.constant 0 : index
    %25 = vector.load %arg6[%c0_20, %c0_21] : memref<9x128xf32, #tpu.memory_space<vmem>>, vector<1x128xf32>
    %26 = vector.shape_cast %25 : vector<1x128xf32> to vector<128xf32>
    %27 = vector.shape_cast %26 : vector<128xf32> to vector<1x128xf32>
    %28 = vector.broadcast %27 : vector<1x128xf32> to vector<256x128xf32>
    %29 = arith.mulf %23, %28 : vector<256x128xf32>
    %c3 = arith.constant 3 : index
    %c0_22 = arith.constant 0 : index
    %30 = vector.load %arg6[%c3, %c0_22] : memref<9x128xf32, #tpu.memory_space<vmem>>, vector<1x128xf32>
    %31 = vector.shape_cast %30 : vector<1x128xf32> to vector<128xf32>
    %32 = vector.shape_cast %31 : vector<128xf32> to vector<1x128xf32>
    %33 = vector.broadcast %32 : vector<1x128xf32> to vector<256x128xf32>
    %34 = arith.mulf %3, %33 : vector<256x128xf32>
    %35 = arith.addf %29, %34 : vector<256x128xf32>
    %c6 = arith.constant 6 : index
    %c0_23 = arith.constant 0 : index
    %36 = vector.load %arg6[%c6, %c0_23] : memref<9x128xf32, #tpu.memory_space<vmem>>, vector<1x128xf32>
    %37 = vector.shape_cast %36 : vector<1x128xf32> to vector<128xf32>
    %38 = vector.shape_cast %37 : vector<128xf32> to vector<1x128xf32>
    %39 = vector.broadcast %38 : vector<1x128xf32> to vector<256x128xf32>
    %40 = arith.mulf %24, %39 : vector<256x128xf32>
    %41 = arith.addf %35, %40 : vector<256x128xf32>
    %c1 = arith.constant 1 : index
    %c0_24 = arith.constant 0 : index
    %42 = vector.load %arg6[%c1, %c0_24] : memref<9x128xf32, #tpu.memory_space<vmem>>, vector<1x128xf32>
    %43 = vector.shape_cast %42 : vector<1x128xf32> to vector<128xf32>
    %44 = vector.shape_cast %43 : vector<128xf32> to vector<1x128xf32>
    %45 = vector.broadcast %44 : vector<1x128xf32> to vector<256x128xf32>
    %46 = arith.mulf %23, %45 : vector<256x128xf32>
    %c4 = arith.constant 4 : index
    %c0_25 = arith.constant 0 : index
    %47 = vector.load %arg6[%c4, %c0_25] : memref<9x128xf32, #tpu.memory_space<vmem>>, vector<1x128xf32>
    %48 = vector.shape_cast %47 : vector<1x128xf32> to vector<128xf32>
    %49 = vector.shape_cast %48 : vector<128xf32> to vector<1x128xf32>
    %50 = vector.broadcast %49 : vector<1x128xf32> to vector<256x128xf32>
    %51 = arith.mulf %3, %50 : vector<256x128xf32>
    %52 = arith.addf %46, %51 : vector<256x128xf32>
    %c7 = arith.constant 7 : index
    %c0_26 = arith.constant 0 : index
    %53 = vector.load %arg6[%c7, %c0_26] : memref<9x128xf32, #tpu.memory_space<vmem>>, vector<1x128xf32>
    %54 = vector.shape_cast %53 : vector<1x128xf32> to vector<128xf32>
    %55 = vector.shape_cast %54 : vector<128xf32> to vector<1x128xf32>
    %56 = vector.broadcast %55 : vector<1x128xf32> to vector<256x128xf32>
    %57 = arith.mulf %24, %56 : vector<256x128xf32>
    %58 = arith.addf %52, %57 : vector<256x128xf32>
    %c2 = arith.constant 2 : index
    %c0_27 = arith.constant 0 : index
    %59 = vector.load %arg6[%c2, %c0_27] : memref<9x128xf32, #tpu.memory_space<vmem>>, vector<1x128xf32>
    %60 = vector.shape_cast %59 : vector<1x128xf32> to vector<128xf32>
    %61 = vector.shape_cast %60 : vector<128xf32> to vector<1x128xf32>
    %62 = vector.broadcast %61 : vector<1x128xf32> to vector<256x128xf32>
    %63 = arith.mulf %23, %62 : vector<256x128xf32>
    %c5 = arith.constant 5 : index
    %c0_28 = arith.constant 0 : index
    %64 = vector.load %arg6[%c5, %c0_28] : memref<9x128xf32, #tpu.memory_space<vmem>>, vector<1x128xf32>
    %65 = vector.shape_cast %64 : vector<1x128xf32> to vector<128xf32>
    %66 = vector.shape_cast %65 : vector<128xf32> to vector<1x128xf32>
    %67 = vector.broadcast %66 : vector<1x128xf32> to vector<256x128xf32>
    %68 = arith.mulf %3, %67 : vector<256x128xf32>
    %69 = arith.addf %63, %68 : vector<256x128xf32>
    %c8 = arith.constant 8 : index
    %c0_29 = arith.constant 0 : index
    %70 = vector.load %arg6[%c8, %c0_29] : memref<9x128xf32, #tpu.memory_space<vmem>>, vector<1x128xf32>
    %71 = vector.shape_cast %70 : vector<1x128xf32> to vector<128xf32>
    %72 = vector.shape_cast %71 : vector<128xf32> to vector<1x128xf32>
    %73 = vector.broadcast %72 : vector<1x128xf32> to vector<256x128xf32>
    %74 = arith.mulf %24, %73 : vector<256x128xf32>
    %75 = arith.addf %69, %74 : vector<256x128xf32>
    %c0_30 = arith.constant 0 : index
    %c0_31 = arith.constant 0 : index
    %76 = vector.load %arg9[%c0_30, %c0_31] : memref<256x1xf32, #tpu.memory_space<vmem>>, vector<256x1xf32>
    %c1_i32 = arith.constant 1 : i32
    %77 = tpu.dynamic_rotate %41 by %c1_i32 dim 0 : vector<256x128xf32>, i32 -> vector<256x128xf32>
    %78 = vector.broadcast %76 : vector<256x1xf32> to vector<256x128xf32>
    %79 = arith.mulf %78, %77 : vector<256x128xf32>
    %80 = arith.addf %79, %58 : vector<256x128xf32>
    %c0_32 = arith.constant 0 : index
    %c0_33 = arith.constant 0 : index
    %81 = vector.load %arg10[%c0_32, %c0_33] : memref<256x1xf32, #tpu.memory_space<vmem>>, vector<256x1xf32>
    %c255_i32 = arith.constant 255 : i32
    %82 = tpu.dynamic_rotate %75 by %c255_i32 dim 0 : vector<256x128xf32>, i32 -> vector<256x128xf32>
    %83 = vector.broadcast %81 : vector<256x1xf32> to vector<256x128xf32>
    %84 = arith.mulf %83, %82 : vector<256x128xf32>
    %85 = arith.addf %80, %84 : vector<256x128xf32>
    %c0_34 = arith.constant 0 : index
    %c0_35 = arith.constant 0 : index
    %86 = vector.load %arg7[%c0_34, %c0_35] : memref<128x8xf32, #tpu.memory_space<vmem>>, vector<128x8xf32>
    %cst_36 = arith.constant dense<0.000000e+00> : vector<256x8xf32>
    %87 = tpu.matmul %85, %86, %cst_36 {dimension_numbers = #tpu.dot_dimension_numbers<[1], [0], [0], [1], [0, 0, 1, 1], [], []>} : vector<256x128xf32>, vector<128x8xf32>, vector<256x8xf32> -> vector<256x8xf32>
    %c0_37 = arith.constant 0 : index
    %c0_38 = arith.constant 0 : index
    %88 = vector.load %arg8[%c0_37, %c0_38] : memref<1x8xf32, #tpu.memory_space<vmem>>, vector<1x8xf32>
    %89 = vector.broadcast %88 : vector<1x8xf32> to vector<256x8xf32>
    %90 = arith.addf %87, %89 : vector<256x8xf32>
    %c0_39 = arith.constant 0 : index
    %c0_40 = arith.constant 0 : index
    %c0_41 = arith.constant 0 : index
    %91 = vector.load %arg11[%c0_39, %c0_40, %c0_41] : memref<1x256x8xf32, #tpu.memory_space<vmem>>, vector<1x256x8xf32>
    %92 = vector.shape_cast %91 : vector<1x256x8xf32> to vector<256x8xf32>
    %93 = vector.shape_cast %90 : vector<256x8xf32> to vector<1x256x8xf32>
    tpu.vector_store %arg11[%c0_39, %c0_40, %c0_41], %93 {strides = array<i32>} : memref<1x256x8xf32, #tpu.memory_space<vmem>>, vector<1x256x8xf32>,
    return
  }
  func.func @transform_0(%arg0: i32, %arg1: i32) -> (i32, i32, i32) {
    %c0_i32 = arith.constant 0 : i32
    %c0_i32_0 = arith.constant 0 : i32
    return %arg0, %arg1, %c0_i32 : i32, i32, i32
  }
  func.func @transform_1(%arg0: i32, %arg1: i32) -> (i32, i32, i32) {
    %c16_i32 = arith.constant 16 : i32
    %0 = arith.muli %arg1, %c16_i32 : i32
    %c1_i32 = arith.constant 1 : i32
    %1 = arith.subi %0, %c1_i32 : i32
    %c0_i32 = arith.constant 0 : i32
    %2 = arith.maxsi %1, %c0_i32 : i32
    %c0_i32_0 = arith.constant 0 : i32
    %c0_i32_1 = arith.constant 0 : i32
    return %arg0, %2, %c0_i32_0 : i32, i32, i32
  }
  func.func @transform_2(%arg0: i32, %arg1: i32) -> (i32, i32, i32) {
    %c16_i32 = arith.constant 16 : i32
    %0 = arith.muli %arg1, %c16_i32 : i32
    %c16_i32_0 = arith.constant 16 : i32
    %1 = arith.addi %0, %c16_i32_0 : i32
    %c15_i32 = arith.constant 15 : i32
    %2 = arith.minsi %1, %c15_i32 : i32
    %c0_i32 = arith.constant 0 : i32
    %c0_i32_1 = arith.constant 0 : i32
    return %arg0, %2, %c0_i32 : i32, i32, i32
  }
  func.func @transform_3(%arg0: i32, %arg1: i32) -> (i32, i32) {
    %c0_i32 = arith.constant 0 : i32
    %c0_i32_0 = arith.constant 0 : i32
    %c0_i32_1 = arith.constant 0 : i32
    return %c0_i32, %c0_i32_0 : i32, i32
  }
  func.func @transform_4(%arg0: i32, %arg1: i32) -> (i32, i32) {
    %c0_i32 = arith.constant 0 : i32
    %c0_i32_0 = arith.constant 0 : i32
    %c0_i32_1 = arith.constant 0 : i32
    return %c0_i32, %c0_i32_0 : i32, i32
  }
  func.func @transform_5(%arg0: i32, %arg1: i32) -> (i32, i32) {
    %c0_i32 = arith.constant 0 : i32
    %c0_i32_0 = arith.constant 0 : i32
    %c0_i32_1 = arith.constant 0 : i32
    return %c0_i32, %c0_i32_0 : i32, i32
  }
  func.func @transform_6(%arg0: i32, %arg1: i32) -> (i32, i32) {
    %c0_i32 = arith.constant 0 : i32
    %c0_i32_0 = arith.constant 0 : i32
    %c0_i32_1 = arith.constant 0 : i32
    return %c0_i32, %c0_i32_0 : i32, i32
  }
  func.func @transform_7(%arg0: i32, %arg1: i32) -> (i32, i32) {
    %c0_i32 = arith.constant 0 : i32
    %c0_i32_0 = arith.constant 0 : i32
    %c0_i32_1 = arith.constant 0 : i32
    return %c0_i32, %c0_i32_0 : i32, i32
  }
  func.func @transform_8(%arg0: i32, %arg1: i32) -> (i32, i32) {
    %c0_i32 = arith.constant 0 : i32
    %c0_i32_0 = arith.constant 0 : i32
    %c0_i32_1 = arith.constant 0 : i32
    return %c0_i32, %c0_i32_0 : i32, i32
  }
  func.func @transform_9(%arg0: i32, %arg1: i32) -> (i32, i32, i32) {
    %c0_i32 = arith.constant 0 : i32
    %c0_i32_0 = arith.constant 0 : i32
    return %arg0, %arg1, %c0_i32 : i32, i32, i32
  }
}

</mosaic_0001>

<llo_original>
// kernel: tpu_custom_call.1
$region0: #{tpu_custom_call.1}
  #allocation0 [shape = 'u32[]', space=smem, size = 0x4, offset = 0x4, fixed_abs, tag = 'smem constant byte address 0x4 - core index']
  #allocation1 [shape = 'u32[144,128]{1,0:T(1,128)}', space=vmem, size = 0x12000, scoped, tag = 'internal scratch']
  #allocation2 [shape = 'f32[288,128]{1,0:T(8,128)}', space=vmem, size = 0x24000, scoped, tag = 'scratch operand']
  %s0 = inlined_call_operand.vmem [shape: f32[2,256,4], index: 0, kind: input, shape index: {}]
  %s1 = inlined_call_operand.vmem [shape: f32[2,256,4], index: 1, kind: input, shape index: {}]
  %s2 = inlined_call_operand.vmem [shape: f32[2,256,4], index: 2, kind: input, shape index: {}]
  %s3 = inlined_call_operand.vmem [shape: f32[4,128], index: 3, kind: input, shape index: {}]
  %s4 = inlined_call_operand.vmem [shape: f32[9,128], index: 4, kind: input, shape index: {}]
  %s5 = inlined_call_operand.vmem [shape: f32[128,8], index: 5, kind: input, shape index: {}]
  %s6 = inlined_call_operand.vmem [shape: f32[1,8], index: 6, kind: input, shape index: {}]
  %s7 = inlined_call_operand.vmem [shape: f32[256,1], index: 7, kind: input, shape index: {}]
  %s8 = inlined_call_operand.vmem [shape: f32[256,1], index: 8, kind: input, shape index: {}]
  %s9 = inlined_call_operand.vmem [shape: f32[2,256,8], index: 9, kind: output, shape index: {}]
  %s10 = sld [smem:[#allocation0]]
  $region69: #{tpu_custom_call.1} parent=0
    _
  %s12 = ssub.s32 1, %s10
  %s13 = scalar_select 0, %s12, %s10
  loop: start=0, step=1, limit=4
  $region2: #{tpu_custom_call.1} parent=0 // loop_pre_header
    _
  $region3: #{tpu_custom_call.1} parent=0 // loop_header
    %s15 = sphi 0, %s19
    %p16 = scmp.ge.s32.totalorder %s15, 4
    %s22 = sphi 0, %s34
    %s23 = sphi 0, %s30
    %s24 = sphi 0, %s22
    %s25 = sphi 0, %s23
    %s26 = sphi 0, %s24
    %s27 = sphi 0, %s25
    %s39 = sphi 0, %s41
    %s42 = sphi 0, %s39
    %s43 = sphi 0, %s42
    %s59 = sphi 0, %s43
    %s75 = sphi 0, %s77
    %s78 = sphi 0, %s75
    %s79 = sphi 0, %s78
    %s95 = sphi 0, %s79
    %s111 = sphi 0, %s113
    %s114 = sphi 0, %s111
    %s115 = sphi 0, %s114
    %s131 = sphi 0, %s115
    %s135 = sphi 0, %s135
    %s137 = sphi 0, %s135
    %s138 = sphi 0, %s137
    %s152 = sphi 0, %s138
    %s156 = sphi 0, %s156
    %s158 = sphi 0, %s156
    %s159 = sphi 0, %s158
    %s173 = sphi 0, %s159
    %s177 = sphi 0, %s177
    %s179 = sphi 0, %s177
    %s180 = sphi 0, %s179
    %s194 = sphi 0, %s180
    %s198 = sphi 0, %s198
    %s200 = sphi 0, %s198
    %s201 = sphi 0, %s200
    %s215 = sphi 0, %s201
    %s219 = sphi 0, %s219
    %s221 = sphi 0, %s219
    %s222 = sphi 0, %s221
    %s236 = sphi 0, %s222
    %s240 = sphi 0, %s240
    %s242 = sphi 0, %s240
    %s243 = sphi 0, %s242
    %s257 = sphi 0, %s243
    %s265 = sphi 0, %s267
    %s268 = sphi 0, %s265
    %s269 = sphi 0, %s268
    %s285 = sphi 0, %s269
  $region4: #{tpu_custom_call.1} parent=0 // loop_header_branch
    %18 = sbr.rel (%p16) target = $region8
  $region5: #{tpu_custom_call.1} parent=0 // loop_body
    %s20 = ssub.s32 %s15, 1
    %s21 = ssub.s32 %s15, 2
    %s28 = sadd.s32 1, %s23
    %p29 = scmp.ge.s32.totalorder %s28, 1
    %s30 = scalar_select %p29, 0, %s28
    %s31 = sadd.s32 1, %s22
    %s32 = scalar_select %p29, %s31, %s22
    %p33 = scmp.ge.s32.totalorder %s32, 2
    %s34 = scalar_select %p33, 0, %s32
    %s35 = ssub.s32 %s22, %s34
    %s36 = ssub.s32 %s23, %s30
    %s37 = sor.u32 %s35, %s36
    %p38 = scmp.eq.s32.totalorder %s37, 0
    %s40 = sadd.s32 %s39, 1
    %s41 = scalar_select %p38, %s39, %s40
    %p44 = pneg %p38
    %p45 = scmp.eq.s32.totalorder %s15, 1
    %p46 = por %p44, %p45
    %p47 = scmp.ne.s32.totalorder %s39, %s42
    %p48 = scmp.eq.s32.totalorder %s15, 0
    %p49 = por %p47, %p48
    %p50 = scmp.ne.s32.totalorder %s39, %s42
    %p51 = scmp.eq.s32.totalorder %s20, 1
    %p52 = por %p50, %p51
    %p53 = scmp.ne.s32.totalorder %s42, %s43
    %p54 = scmp.eq.s32.totalorder %s20, 0
    %p55 = por %p53, %p54
    %p56 = scmp.ne.s32.totalorder %s42, %s43
    %p57 = scmp.eq.s32.totalorder %s21, 1
    %p58 = por %p56, %p57
    %p60 = scmp.ne.s32.totalorder %s43, %s59
    %p61 = scmp.eq.s32.totalorder %s21, 0
    %p62 = por %p60, %p61
    %s63 = smul.u32 %s23, 16
    %s64 = ssub.s32 %s63, 1
    %p65 = scmp.gt.s32.totalorder %s64, 0
    %s66 = scalar_select %p65, %s64, 0
    %s67 = smul.u32 %s30, 16
    %s68 = ssub.s32 %s67, 1
    %p69 = scmp.gt.s32.totalorder %s68, 0
    %s70 = scalar_select %p69, %s68, 0
    %s71 = ssub.s32 %s22, %s34
    %s72 = ssub.s32 %s66, %s70
    %s73 = sor.u32 %s71, %s72
    %p74 = scmp.eq.s32.totalorder %s73, 0
    %s76 = sadd.s32 %s75, 1
    %s77 = scalar_select %p74, %s75, %s76
    %p80 = pneg %p74
    %p81 = scmp.eq.s32.totalorder %s15, 1
    %p82 = por %p80, %p81
    %p83 = scmp.ne.s32.totalorder %s75, %s78
    %p84 = scmp.eq.s32.totalorder %s15, 0
    %p85 = por %p83, %p84
    %p86 = scmp.ne.s32.totalorder %s75, %s78
    %p87 = scmp.eq.s32.totalorder %s20, 1
    %p88 = por %p86, %p87
    %p89 = scmp.ne.s32.totalorder %s78, %s79
    %p90 = scmp.eq.s32.totalorder %s20, 0
    %p91 = por %p89, %p90
    %p92 = scmp.ne.s32.totalorder %s78, %s79
    %p93 = scmp.eq.s32.totalorder %s21, 1
    %p94 = por %p92, %p93
    %p96 = scmp.ne.s32.totalorder %s79, %s95
    %p97 = scmp.eq.s32.totalorder %s21, 0
    %p98 = por %p96, %p97
    %s99 = smul.u32 %s23, 16
    %s100 = sadd.s32 %s99, 16
    %p101 = scmp.lt.s32.totalorder %s100, 15
    %s102 = scalar_select %p101, %s100, 15
    %s103 = smul.u32 %s30, 16
    %s104 = sadd.s32 %s103, 16
    %p105 = scmp.lt.s32.totalorder %s104, 15
    %s106 = scalar_select %p105, %s104, 15
    %s107 = ssub.s32 %s22, %s34
    %s108 = ssub.s32 %s102, %s106
    %s109 = sor.u32 %s107, %s108
    %p110 = scmp.eq.s32.totalorder %s109, 0
    %s112 = sadd.s32 %s111, 1
    %s113 = scalar_select %p110, %s111, %s112
    %p116 = pneg %p110
    %p117 = scmp.eq.s32.totalorder %s15, 1
    %p118 = por %p116, %p117
    %p119 = scmp.ne.s32.totalorder %s111, %s114
    %p120 = scmp.eq.s32.totalorder %s15, 0
    %p121 = por %p119, %p120
    %p122 = scmp.ne.s32.totalorder %s111, %s114
    %p123 = scmp.eq.s32.totalorder %s20, 1
    %p124 = por %p122, %p123
    %p125 = scmp.ne.s32.totalorder %s114, %s115
    %p126 = scmp.eq.s32.totalorder %s20, 0
    %p127 = por %p125, %p126
    %p128 = scmp.ne.s32.totalorder %s114, %s115
    %p129 = scmp.eq.s32.totalorder %s21, 1
    %p130 = por %p128, %p129
    %p132 = scmp.ne.s32.totalorder %s115, %s131
    %p133 = scmp.eq.s32.totalorder %s21, 0
    %p134 = por %p132, %p133
    %s136 = sadd.s32 %s135, 1
    %p139 = scmp.eq.s32.totalorder %s15, 1
    %p140 = scmp.ne.s32.totalorder %s135, %s137
    %p141 = scmp.eq.s32.totalorder %s15, 0
    %p142 = por %p140, %p141
    %p143 = scmp.ne.s32.totalorder %s135, %s137
    %p144 = scmp.eq.s32.totalorder %s20, 1
    %p145 = por %p143, %p144
    %p146 = scmp.ne.s32.totalorder %s137, %s138
    %p147 = scmp.eq.s32.totalorder %s20, 0
    %p148 = por %p146, %p147
    %p149 = scmp.ne.s32.totalorder %s137, %s138
    %p150 = scmp.eq.s32.totalorder %s21, 1
    %p151 = por %p149, %p150
    %p153 = scmp.ne.s32.totalorder %s138, %s152
    %p154 = scmp.eq.s32.totalorder %s21, 0
    %p155 = por %p153, %p154
    %s157 = sadd.s32 %s156, 1
    %p160 = scmp.eq.s32.totalorder %s15, 1
    %p161 = scmp.ne.s32.totalorder %s156, %s158
    %p162 = scmp.eq.s32.totalorder %s15, 0
    %p163 = por %p161, %p162
    %p164 = scmp.ne.s32.totalorder %s156, %s158
    %p165 = scmp.eq.s32.totalorder %s20, 1
    %p166 = por %p164, %p165
    %p167 = scmp.ne.s32.totalorder %s158, %s159
    %p168 = scmp.eq.s32.totalorder %s20, 0
    %p169 = por %p167, %p168
    %p170 = scmp.ne.s32.totalorder %s158, %s159
    %p171 = scmp.eq.s32.totalorder %s21, 1
    %p172 = por %p170, %p171
    %p174 = scmp.ne.s32.totalorder %s159, %s173
    %p175 = scmp.eq.s32.totalorder %s21, 0
    %p176 = por %p174, %p175
    %s178 = sadd.s32 %s177, 1
    %p181 = scmp.eq.s32.totalorder %s15, 1
    %p182 = scmp.ne.s32.totalorder %s177, %s179
    %p183 = scmp.eq.s32.totalorder %s15, 0
    %p184 = por %p182, %p183
    %p185 = scmp.ne.s32.totalorder %s177, %s179
    %p186 = scmp.eq.s32.totalorder %s20, 1
    %p187 = por %p185, %p186
    %p188 = scmp.ne.s32.totalorder %s179, %s180
    %p189 = scmp.eq.s32.totalorder %s20, 0
    %p190 = por %p188, %p189
    %p191 = scmp.ne.s32.totalorder %s179, %s180
    %p192 = scmp.eq.s32.totalorder %s21, 1
    %p193 = por %p191, %p192
    %p195 = scmp.ne.s32.totalorder %s180, %s194
    %p196 = scmp.eq.s32.totalorder %s21, 0
    %p197 = por %p195, %p196
    %s199 = sadd.s32 %s198, 1
    %p202 = scmp.eq.s32.totalorder %s15, 1
    %p203 = scmp.ne.s32.totalorder %s198, %s200
    %p204 = scmp.eq.s32.totalorder %s15, 0
    %p205 = por %p203, %p204
    %p206 = scmp.ne.s32.totalorder %s198, %s200
    %p207 = scmp.eq.s32.totalorder %s20, 1
    %p208 = por %p206, %p207
    %p209 = scmp.ne.s32.totalorder %s200, %s201
    %p210 = scmp.eq.s32.totalorder %s20, 0
    %p211 = por %p209, %p210
    %p212 = scmp.ne.s32.totalorder %s200, %s201
    %p213 = scmp.eq.s32.totalorder %s21, 1
    %p214 = por %p212, %p213
    %p216 = scmp.ne.s32.totalorder %s201, %s215
    %p217 = scmp.eq.s32.totalorder %s21, 0
    %p218 = por %p216, %p217
    %s220 = sadd.s32 %s219, 1
    %p223 = scmp.eq.s32.totalorder %s15, 1
    %p224 = scmp.ne.s32.totalorder %s219, %s221
    %p225 = scmp.eq.s32.totalorder %s15, 0
    %p226 = por %p224, %p225
    %p227 = scmp.ne.s32.totalorder %s219, %s221
    %p228 = scmp.eq.s32.totalorder %s20, 1
    %p229 = por %p227, %p228
    %p230 = scmp.ne.s32.totalorder %s221, %s222
    %p231 = scmp.eq.s32.totalorder %s20, 0
    %p232 = por %p230, %p231
    %p233 = scmp.ne.s32.totalorder %s221, %s222
    %p234 = scmp.eq.s32.totalorder %s21, 1
    %p235 = por %p233, %p234
    %p237 = scmp.ne.s32.totalorder %s222, %s236
    %p238 = scmp.eq.s32.totalorder %s21, 0
    %p239 = por %p237, %p238
    %s241 = sadd.s32 %s240, 1
    %p244 = scmp.eq.s32.totalorder %s15, 1
    %p245 = scmp.ne.s32.totalorder %s240, %s242
    %p246 = scmp.eq.s32.totalorder %s15, 0
    %p247 = por %p245, %p246
    %p248 = scmp.ne.s32.totalorder %s240, %s242
    %p249 = scmp.eq.s32.totalorder %s20, 1
    %p250 = por %p248, %p249
    %p251 = scmp.ne.s32.totalorder %s242, %s243
    %p252 = scmp.eq.s32.totalorder %s20, 0
    %p253 = por %p251, %p252
    %p254 = scmp.ne.s32.totalorder %s242, %s243
    %p255 = scmp.eq.s32.totalorder %s21, 1
    %p256 = por %p254, %p255
    %p258 = scmp.ne.s32.totalorder %s243, %s257
    %p259 = scmp.eq.s32.totalorder %s21, 0
    %p260 = por %p258, %p259
    %s261 = ssub.s32 %s22, %s34
    %s262 = ssub.s32 %s23, %s30
    %s263 = sor.u32 %s261, %s262
    %p264 = scmp.eq.s32.totalorder %s263, 0
    %s266 = sadd.s32 %s265, 1
    %s267 = scalar_select %p264, %s265, %s266
    %p270 = pneg %p264
    %p271 = scmp.eq.s32.totalorder %s15, 1
    %p272 = por %p270, %p271
    %p273 = scmp.ne.s32.totalorder %s265, %s268
    %p274 = scmp.eq.s32.totalorder %s15, 0
    %p275 = por %p273, %p274
    %p276 = scmp.ne.s32.totalorder %s265, %s268
    %p277 = scmp.eq.s32.totalorder %s20, 1
    %p278 = por %p276, %p277
    %p279 = scmp.ne.s32.totalorder %s268, %s269
    %p280 = scmp.eq.s32.totalorder %s20, 0
    %p281 = por %p279, %p280
    %p282 = scmp.ne.s32.totalorder %s268, %s269
    %p283 = scmp.eq.s32.totalorder %s21, 1
    %p284 = por %p282, %p283
    %p286 = scmp.ne.s32.totalorder %s269, %s285
    %p287 = scmp.eq.s32.totalorder %s21, 0
    %p288 = por %p286, %p287
    %p289 = scmp.le.s32.totalorder 1, %s15
    %p290 = scmp.lt.s32.totalorder %s15, 3
    %p291 = pnand %p289, %p290
    %p292 = pneg %p291
    // Predicated region
    $region9: #{tpu_custom_call.1} parent=5 // pred_check
      _
    $region10: #{tpu_custom_call.1} parent=5 // pred_check_branch
      %294 = sbr.rel (%p291) target = $region12
    $region11: #{tpu_custom_call.1} parent=5 // pred_region
      %s295 = ssub.s32 %s15, 1
      // Predicated region
      $region13: #{tpu_custom_call.1} parent=11 // pred_check
        %p296 = pneg %p148
      $region14: #{tpu_custom_call.1} parent=11 // pred_check_branch
        %298 = sbr.rel (%p296) target = $region16
      $region15: #{tpu_custom_call.1} parent=11 // pred_region
        _
      $region16: #{tpu_custom_call.1} parent=11 // pred_fallthru
        _
      // Predicated region
      $region17: #{tpu_custom_call.1} parent=11 // pred_check
        %p299 = pneg %p169
      $region18: #{tpu_custom_call.1} parent=11 // pred_check_branch
        %301 = sbr.rel (%p299) target = $region20
      $region19: #{tpu_custom_call.1} parent=11 // pred_region
        _
      $region20: #{tpu_custom_call.1} parent=11 // pred_fallthru
        _
      // Predicated region
      $region21: #{tpu_custom_call.1} parent=11 // pred_check
        %p302 = pneg %p190
      $region22: #{tpu_custom_call.1} parent=11 // pred_check_branch
        %304 = sbr.rel (%p302) target = $region24
      $region23: #{tpu_custom_call.1} parent=11 // pred_region
        _
      $region24: #{tpu_custom_call.1} parent=11 // pred_fallthru
        _
      // Predicated region
      $region25: #{tpu_custom_call.1} parent=11 // pred_check
        %p305 = pneg %p211
      $region26: #{tpu_custom_call.1} parent=11 // pred_check_branch
        %307 = sbr.rel (%p305) target = $region28
      $region27: #{tpu_custom_call.1} parent=11 // pred_region
        _
      $region28: #{tpu_custom_call.1} parent=11 // pred_fallthru
        _
      // Predicated region
      $region29: #{tpu_custom_call.1} parent=11 // pred_check
        %p308 = pneg %p232
      $region30: #{tpu_custom_call.1} parent=11 // pred_check_branch
        %310 = sbr.rel (%p308) target = $region32
      $region31: #{tpu_custom_call.1} parent=11 // pred_region
        _
      $region32: #{tpu_custom_call.1} parent=11 // pred_fallthru
        _
      // Predicated region
      $region33: #{tpu_custom_call.1} parent=11 // pred_check
        %p311 = pneg %p253
      $region34: #{tpu_custom_call.1} parent=11 // pred_check_branch
        %313 = sbr.rel (%p311) target = $region36
      $region35: #{tpu_custom_call.1} parent=11 // pred_region
        _
      $region36: #{tpu_custom_call.1} parent=11 // pred_fallthru
        _
    $region12: #{tpu_custom_call.1} parent=5 // pred_fallthru
      _
    %p314 = scmp.lt.s32.totalorder %s15, 2
    // Predicated region
    $region37: #{tpu_custom_call.1} parent=5 // pred_check
      %p315 = pneg %p314
    $region38: #{tpu_custom_call.1} parent=5 // pred_check_branch
      %317 = sbr.rel (%p315) target = $region40
    $region39: #{tpu_custom_call.1} parent=5 // pred_region
      // Predicated region
      $region41: #{tpu_custom_call.1} parent=39 // pred_check
        %p318 = pneg %p49
      $region42: #{tpu_custom_call.1} parent=39 // pred_check_branch
        %320 = sbr.rel (%p318) target = $region44
      $region43: #{tpu_custom_call.1} parent=39 // pred_region
        %s321 = smul.u32 32, %s23
        %p322 = scmp.lt.s32.totalorder %s22, 1
        %s323 = scalar_select %p322, %s22, 1
        %p324 = scmp.lt.s32.totalorder %s321, 31
        %s325 = scalar_select %p324, %s321, 31
        %s326 = smul.addr %s323, 32
        %s327 = sadd.s32 %s325, %s326
        %s328 = smul.addr %s327, 8
        %s329 = scalar_lea.vmem %s0, %s328
        %s330 = smul.u32 32, %s23
      $region44: #{tpu_custom_call.1} parent=39 // pred_fallthru
        _
      // Predicated region
      $region45: #{tpu_custom_call.1} parent=39 // pred_check
        %p331 = pneg %p85
      $region46: #{tpu_custom_call.1} parent=39 // pred_check_branch
        %333 = sbr.rel (%p331) target = $region48
      $region47: #{tpu_custom_call.1} parent=39 // pred_region
        %s334 = smul.u32 %s23, 16
        %s335 = ssub.s32 %s334, 1
        %p336 = scmp.gt.s32.totalorder %s335, 0
        %s337 = scalar_select %p336, %s335, 0
        %s338 = smul.u32 2, %s337
        %p339 = scmp.lt.s32.totalorder %s22, 1
        %s340 = scalar_select %p339, %s22, 1
        %p341 = scmp.lt.s32.totalorder %s338, 31
        %s342 = scalar_select %p341, %s338, 31
        %s343 = smul.addr %s340, 32
        %s344 = sadd.s32 %s342, %s343
        %s345 = smul.addr %s344, 8
        %s346 = scalar_lea.vmem %s1, %s345
        %s347 = smul.u32 %s23, 16
        %s348 = ssub.s32 %s347, 1
        %p349 = scmp.gt.s32.totalorder %s348, 0
        %s350 = scalar_select %p349, %s348, 0
        %s351 = smul.u32 2, %s350
      $region48: #{tpu_custom_call.1} parent=39 // pred_fallthru
        _
      // Predicated region
      $region49: #{tpu_custom_call.1} parent=39 // pred_check
        %p352 = pneg %p121
      $region50: #{tpu_custom_call.1} parent=39 // pred_check_branch
        %354 = sbr.rel (%p352) target = $region52
      $region51: #{tpu_custom_call.1} parent=39 // pred_region
        %s355 = smul.u32 %s23, 16
        %s356 = sadd.s32 %s355, 16
        %p357 = scmp.lt.s32.totalorder %s356, 15
        %s358 = scalar_select %p357, %s356, 15
        %s359 = smul.u32 2, %s358
        %p360 = scmp.lt.s32.totalorder %s22, 1
        %s361 = scalar_select %p360, %s22, 1
        %p362 = scmp.lt.s32.totalorder %s359, 31
        %s363 = scalar_select %p362, %s359, 31
        %s364 = smul.addr %s361, 32
        %s365 = sadd.s32 %s363, %s364
        %s366 = smul.addr %s365, 8
        %s367 = scalar_lea.vmem %s2, %s366
        %s368 = smul.u32 %s23, 16
        %s369 = sadd.s32 %s368, 16
        %p370 = scmp.lt.s32.totalorder %s369, 15
        %s371 = scalar_select %p370, %s369, 15
        %s372 = smul.u32 2, %s371
      $region52: #{tpu_custom_call.1} parent=39 // pred_fallthru
        _
    $region40: #{tpu_custom_call.1} parent=5 // pred_fallthru
      _
    %p373 = scmp.le.s32.totalorder 1, %s15
    %p374 = scmp.lt.s32.totalorder %s15, 3
    %p375 = pnand %p373, %p374
    %p376 = pneg %p375
    // Predicated region
    $region53: #{tpu_custom_call.1} parent=5 // pred_check
      _
    $region54: #{tpu_custom_call.1} parent=5 // pred_check_branch
      %378 = sbr.rel (%p375) target = $region56
    $region55: #{tpu_custom_call.1} parent=5 // pred_region
      %s379 = ssub.s32 %s15, 1
      %s380 = smul.u32 32, %s25
      %p381 = scmp.lt.s32.totalorder %s24, 1
      %s382 = scalar_select %p381, %s24, 1
      %p383 = scmp.lt.s32.totalorder %s380, 31
      %s384 = scalar_select %p383, %s380, 31
      %s385 = smul.addr %s382, 32
      %s386 = sadd.s32 %s384, %s385
      %s387 = smul.addr %s386, 8
      %s388 = scalar_lea.vmem %s0, %s387
      %p389 = pneg %p55
      %p390 = pneg %p52
      %s391 = smul.u32 %s25, 16
      %s392 = ssub.s32 %s391, 1
      %p393 = scmp.gt.s32.totalorder %s392, 0
      %s394 = scalar_select %p393, %s392, 0
      %s395 = smul.u32 2, %s394
      %p396 = scmp.lt.s32.totalorder %s24, 1
      %s397 = scalar_select %p396, %s24, 1
      %p398 = scmp.lt.s32.totalorder %s395, 31
      %s399 = scalar_select %p398, %s395, 31
      %s400 = smul.addr %s397, 32
      %s401 = sadd.s32 %s399, %s400
      %s402 = smul.addr %s401, 8
      %s403 = scalar_lea.vmem %s1, %s402
      %p404 = pneg %p91
      %p405 = pneg %p88
      %s406 = smul.u32 %s25, 16
      %s407 = sadd.s32 %s406, 16
      %p408 = scmp.lt.s32.totalorder %s407, 15
      %s409 = scalar_select %p408, %s407, 15
      %s410 = smul.u32 2, %s409
      %p411 = scmp.lt.s32.totalorder %s24, 1
      %s412 = scalar_select %p411, %s24, 1
      %p413 = scmp.lt.s32.totalorder %s410, 31
      %s414 = scalar_select %p413, %s410, 31
      %s415 = smul.addr %s412, 32
      %s416 = sadd.s32 %s414, %s415
      %s417 = smul.addr %s416, 8
      %s418 = scalar_lea.vmem %s2, %s417
      %p419 = pneg %p127
      %p420 = pneg %p124
      %p421 = pneg %p148
      %p422 = pneg %p145
      %p423 = pneg %p169
      %p424 = pneg %p166
      %p425 = pneg %p190
      %p426 = pneg %p187
      %p427 = pneg %p211
      %p428 = pneg %p208
      %p429 = pneg %p232
      %p430 = pneg %p229
      %p431 = pneg %p253
      %p432 = pneg %p250
      %p433 = pneg %p281
      %p434 = pneg %p278
      %s435 = smul.u32 32, %s25
      %p436 = scmp.lt.s32.totalorder %s24, 1
      %s437 = scalar_select %p436, %s24, 1
      %p438 = scmp.lt.s32.totalorder %s435, 31
      %s439 = scalar_select %p438, %s435, 31
      %s440 = smul.addr %s437, 32
      %s441 = sadd.s32 %s439, %s440
      %s442 = smul.addr %s441, 8
      %s443 = scalar_lea.vmem %s9, %s442
      %s444 = smul.u32 32, %s25
      %p445 = scmp.lt.s32.totalorder %s24, 1
      %s446 = scalar_select %p445, %s24, 1
      %p447 = scmp.lt.s32.totalorder %s444, 31
      %s448 = scalar_select %p447, %s444, 31
      %s449 = smul.addr %s446, 32
      %s450 = sadd.s32 %s448, %s449
      %s451 = smul.addr %s450, 8
      %s452 = scalar_lea.vmem %s0, %s451
      %s453 = smul.u32 32, %s25
      %s454 = smul.u32 %s25, 16
      %s455 = ssub.s32 %s454, 1
      %p456 = scmp.gt.s32.totalorder %s455, 0
      %s457 = scalar_select %p456, %s455, 0
      %s458 = smul.u32 2, %s457
      %p459 = scmp.lt.s32.totalorder %s24, 1
      %s460 = scalar_select %p459, %s24, 1
      %p461 = scmp.lt.s32.totalorder %s458, 31
      %s462 = scalar_select %p461, %s458, 31
      %s463 = smul.addr %s460, 32
      %s464 = sadd.s32 %s462, %s463
      %s465 = smul.addr %s464, 8
      %s466 = scalar_lea.vmem %s1, %s465
      %s467 = smul.u32 %s25, 16
      %s468 = ssub.s32 %s467, 1
      %p469 = scmp.gt.s32.totalorder %s468, 0
      %s470 = scalar_select %p469, %s468, 0
      %s471 = smul.u32 2, %s470
      %s472 = smul.u32 %s25, 16
      %s473 = sadd.s32 %s472, 16
      %p474 = scmp.lt.s32.totalorder %s473, 15
      %s475 = scalar_select %p474, %s473, 15
      %s476 = smul.u32 2, %s475
      %p477 = scmp.lt.s32.totalorder %s24, 1
      %s478 = scalar_select %p477, %s24, 1
      %p479 = scmp.lt.s32.totalorder %s476, 31
      %s480 = scalar_select %p479, %s476, 31
      %s481 = smul.addr %s478, 32
      %s482 = sadd.s32 %s480, %s481
      %s483 = smul.addr %s482, 8
      %s484 = scalar_lea.vmem %s2, %s483
      %s485 = smul.u32 %s25, 16
      %s486 = sadd.s32 %s485, 16
      %p487 = scmp.lt.s32.totalorder %s486, 15
      %s488 = scalar_select %p487, %s486, 15
      %s489 = smul.u32 2, %s488
      %s490 = smul.u32 32, %s25
      %p491 = scmp.lt.s32.totalorder %s24, 1
      %s492 = scalar_select %p491, %s24, 1
      %p493 = scmp.lt.s32.totalorder %s490, 31
      %s494 = scalar_select %p493, %s490, 31
      %s495 = smul.addr %s492, 32
      %s496 = sadd.s32 %s494, %s495
      %s497 = smul.addr %s496, 8
      %s498 = scalar_lea.vmem %s9, %s497
      %s499 = smul.u32 32, %s25
      %v500 = vld [vmem:[%s3] sm:$0xf]
      %v501 = vld [vmem:[%s452] sm:$0xff]
      %v502 = vld [vmem:[%s452 + $0x8] sm:$0xff]
      %v503 = vld [vmem:[%s452 + $0x10] sm:$0xff]
      %v504 = vld [vmem:[%s452 + $0x18] sm:$0xff]
      %v505 = vld [vmem:[%s452 + $0x20] sm:$0xff]
      %v506 = vld [vmem:[%s452 + $0x28] sm:$0xff]
      %v507 = vld [vmem:[%s452 + $0x30] sm:$0xff]
      %v508 = vld [vmem:[%s452 + $0x38] sm:$0xff]
      %v509 = vld [vmem:[%s452 + $0x40] sm:$0xff]
      %v510 = vld [vmem:[%s452 + $0x48] sm:$0xff]
      %v511 = vld [vmem:[%s452 + $0x50] sm:$0xff]
      %v512 = vld [vmem:[%s452 + $0x58] sm:$0xff]
      %v513 = vld [vmem:[%s452 + $0x60] sm:$0xff]
      %v514 = vld [vmem:[%s452 + $0x68] sm:$0xff]
      %v515 = vld [vmem:[%s452 + $0x70] sm:$0xff]
      %v516 = vld [vmem:[%s452 + $0x78] sm:$0xff]
      %v517 = vld [vmem:[%s452 + $0x80] sm:$0xff]
      %v518 = vld [vmem:[%s452 + $0x88] sm:$0xff]
      %v519 = vld [vmem:[%s452 + $0x90] sm:$0xff]
      %v520 = vld [vmem:[%s452 + $0x98] sm:$0xff]
      %v521 = vld [vmem:[%s452 + $0xa0] sm:$0xff]
      %v522 = vld [vmem:[%s452 + $0xa8] sm:$0xff]
      %v523 = vld [vmem:[%s452 + $0xb0] sm:$0xff]
      %v524 = vld [vmem:[%s452 + $0xb8] sm:$0xff]
      %v525 = vld [vmem:[%s452 + $0xc0] sm:$0xff]
      %v526 = vld [vmem:[%s452 + $0xc8] sm:$0xff]
      %v527 = vld [vmem:[%s452 + $0xd0] sm:$0xff]
      %v528 = vld [vmem:[%s452 + $0xd8] sm:$0xff]
      %v529 = vld [vmem:[%s452 + $0xe0] sm:$0xff]
      %v530 = vld [vmem:[%s452 + $0xe8] sm:$0xff]
      %v531 = vld [vmem:[%s452 + $0xf0] sm:$0xff]
      %v532 = vld [vmem:[%s452 + $0xf8] sm:$0xff]
      %vm533 = vcmask 31744
      %v535 = vsel %vm533, %v501, 0
      %v538 = vsel %vm533, %v502, 0
      %v541 = vsel %vm533, %v503, 0
      %v544 = vsel %vm533, %v504, 0
      %v547 = vsel %vm533, %v505, 0
      %v550 = vsel %vm533, %v506, 0
      %v553 = vsel %vm533, %v507, 0
      %v556 = vsel %vm533, %v508, 0
      %v559 = vsel %vm533, %v509, 0
      %v562 = vsel %vm533, %v510, 0
      %v565 = vsel %vm533, %v511, 0
      %v568 = vsel %vm533, %v512, 0
      %v571 = vsel %vm533, %v513, 0
      %v574 = vsel %vm533, %v514, 0
      %v577 = vsel %vm533, %v515, 0
      %v580 = vsel %vm533, %v516, 0
      %v583 = vsel %vm533, %v517, 0
      %v586 = vsel %vm533, %v518, 0
      %v589 = vsel %vm533, %v519, 0
      %v592 = vsel %vm533, %v520, 0
      %v595 = vsel %vm533, %v521, 0
      %v598 = vsel %vm533, %v522, 0
      %v601 = vsel %vm533, %v523, 0
      %v604 = vsel %vm533, %v524, 0
      %v607 = vsel %vm533, %v525, 0
      %v610 = vsel %vm533, %v526, 0
      %v613 = vsel %vm533, %v527, 0
      %v616 = vsel %vm533, %v528, 0
      %v619 = vsel %vm533, %v529, 0
      %v622 = vsel %vm533, %v530, 0
      %v625 = vsel %vm533, %v531, 0
      %v628 = vsel %vm533, %v532, 0
      %vm630 = vcmask 1043456
      %v632 = vsel %vm630, %v500, 0
      %634 = vmatprep.subr.mxu0 0.0
      %635 = vmatpush1.msra.mxu0 %v632
      %636 = vmatprep.subr.mxu0 0.0
      %637 = vmatpush1.msra.mxu0 0.0
      %638 = vmatprep.subr.mxu0 0.0
      %639 = vmatpush1.msra.mxu0 0.0
      %640 = vmatprep.subr.mxu0 0.0
      %641 = vmatpush1.msra.mxu0 0.0
      %642 = vmatprep.subr.mxu0 0.0
      %643 = vmatpush1.msra.mxu0 0.0
      %644 = vmatprep.subr.mxu0 0.0
      %645 = vmatpush1.msra.mxu0 0.0
      %646 = vmatprep.subr.mxu0 0.0
      %647 = vmatpush1.msra.mxu0 0.0
      %648 = vmatprep.subr.mxu0 0.0
      %649 = vmatpush1.msra.mxu0 0.0
      %650 = vmatprep.subr.mxu0 0.0
      %651 = vmatpush1.msra.mxu0 0.0
      %652 = vmatprep.subr.mxu0 0.0
      %653 = vmatpush1.msra.mxu0 0.0
      %654 = vmatprep.subr.mxu0 0.0
      %655 = vmatpush1.msra.mxu0 0.0
      %656 = vmatprep.subr.mxu0 0.0
      %657 = vmatpush1.msra.mxu0 0.0
      %658 = vmatprep.subr.mxu0 0.0
      %659 = vmatpush1.msra.mxu0 0.0
      %660 = vmatprep.subr.mxu0 0.0
      %661 = vmatpush1.msra.mxu0 0.0
      %662 = vmatprep.subr.mxu0 0.0
      %663 = vmatpush1.msra.mxu0 0.0
      %664 = vmatprep.subr.mxu0 0.0
      %665 = vmatpush1.msra.mxu0 0.0
      %666 = vmatprep.subr.mxu0 0.0
      %667 = vmatpush1.msra.mxu0 0.0
      %668 = vmatprep.subr.mxu0 0.0
      %669 = vmatpush1.msra.mxu0 0.0
      %670 = vmatprep.subr.mxu0 0.0
      %671 = vmatpush1.msra.mxu0 0.0
      %672 = vmatprep.subr.mxu0 0.0
      %673 = vmatpush1.msra.mxu0 0.0
      %674 = vmatprep.subr.mxu0 0.0
      %675 = vmatpush1.msra.mxu0 0.0
      %676 = vmatprep.subr.mxu0 0.0
      %677 = vmatpush1.msra.mxu0 0.0
      %678 = vmatprep.subr.mxu0 0.0
      %679 = vmatpush1.msra.mxu0 0.0
      %680 = vmatprep.subr.mxu0 0.0
      %681 = vmatpush1.msra.mxu0 0.0
      %682 = vmatprep.subr.mxu0 0.0
      %683 = vmatpush1.msra.mxu0 0.0
      %684 = vmatprep.subr.mxu0 0.0
      %685 = vmatpush1.msra.mxu0 0.0
      %686 = vmatprep.subr.mxu0 0.0
      %687 = vmatpush1.msra.mxu0 0.0
      %688 = vmatprep.subr.mxu0 0.0
      %689 = vmatpush1.msra.mxu0 0.0
      %690 = vmatprep.subr.mxu0 0.0
      %691 = vmatpush1.msra.mxu0 0.0
      %692 = vmatprep.subr.mxu0 0.0
      %693 = vmatpush1.msra.mxu0 0.0
      %694 = vmatprep.subr.mxu0 0.0
      %695 = vmatpush1.msra.mxu0 0.0
      %696 = vmatprep.subr.mxu0 0.0
      %697 = vmatpush1.msra.mxu0 0.0
      %698 = vmatprep.mubr.f32.mxu0 0.0
      %699 = vmatmul.mubr.f32.gmra.mrb[0].mxu0 %v535
      %v700 = vpop.f32.mrb[0].mxu0
      %v701 = vadd.f32 0.0, %v700
      %v702 = vpop.f32.mrb[0].mxu0
      %703 = vmatprep.mubr.f32.mxu0 0.0
      %704 = vmatmul.mubr.f32.gmra.mrb[0].mxu0 %v538
      %v705 = vpop.f32.mrb[0].mxu0
      %v706 = vadd.f32 0.0, %v705
      %v707 = vpop.f32.mrb[0].mxu0
      %708 = vmatprep.mubr.f32.mxu0 0.0
      %709 = vmatmul.mubr.f32.gmra.mrb[0].mxu0 %v541
      %v710 = vpop.f32.mrb[0].mxu0
      %v711 = vadd.f32 0.0, %v710
      %v712 = vpop.f32.mrb[0].mxu0
      %713 = vmatprep.mubr.f32.mxu0 0.0
      %714 = vmatmul.mubr.f32.gmra.mrb[0].mxu0 %v544
      %v715 = vpop.f32.mrb[0].mxu0
      %v716 = vadd.f32 0.0, %v715
      %v717 = vpop.f32.mrb[0].mxu0
      %718 = vmatprep.mubr.f32.mxu0 0.0
      %719 = vmatmul.mubr.f32.gmra.mrb[0].mxu0 %v547
      %v720 = vpop.f32.mrb[0].mxu0
      %v721 = vadd.f32 0.0, %v720
      %v722 = vpop.f32.mrb[0].mxu0
      %723 = vmatprep.mubr.f32.mxu0 0.0
      %724 = vmatmul.mubr.f32.gmra.mrb[0].mxu0 %v550
      %v725 = vpop.f32.mrb[0].mxu0
      %v726 = vadd.f32 0.0, %v725
      %v727 = vpop.f32.mrb[0].mxu0
      %728 = vmatprep.mubr.f32.mxu0 0.0
      %729 = vmatmul.mubr.f32.gmra.mrb[0].mxu0 %v553
      %v730 = vpop.f32.mrb[0].mxu0
      %v731 = vadd.f32 0.0, %v730
      %v732 = vpop.f32.mrb[0].mxu0
      %733 = vmatprep.mubr.f32.mxu0 0.0
      %734 = vmatmul.mubr.f32.gmra.mrb[0].mxu0 %v556
      %v735 = vpop.f32.mrb[0].mxu0
      %v736 = vadd.f32 0.0, %v735
      %v737 = vpop.f32.mrb[0].mxu0
      %738 = vmatprep.mubr.f32.mxu0 0.0
      %739 = vmatmul.mubr.f32.gmra.mrb[0].mxu0 %v559
      %v740 = vpop.f32.mrb[0].mxu0
      %v741 = vadd.f32 0.0, %v740
      %v742 = vpop.f32.mrb[0].mxu0
      %743 = vmatprep.mubr.f32.mxu0 0.0
      %744 = vmatmul.mubr.f32.gmra.mrb[0].mxu0 %v562
      %v745 = vpop.f32.mrb[0].mxu0
      %v746 = vadd.f32 0.0, %v745
      %v747 = vpop.f32.mrb[0].mxu0
      %748 = vmatprep.mubr.f32.mxu0 0.0
      %749 = vmatmul.mubr.f32.gmra.mrb[0].mxu0 %v565
      %v750 = vpop.f32.mrb[0].mxu0
      %v751 = vadd.f32 0.0, %v750
      %v752 = vpop.f32.mrb[0].mxu0
      %753 = vmatprep.mubr.f32.mxu0 0.0
      %754 = vmatmul.mubr.f32.gmra.mrb[0].mxu0 %v568
      %v755 = vpop.f32.mrb[0].mxu0
      %v756 = vadd.f32 0.0, %v755
      %v757 = vpop.f32.mrb[0].mxu0
      %758 = vmatprep.mubr.f32.mxu0 0.0
      %759 = vmatmul.mubr.f32.gmra.mrb[0].mxu0 %v571
      %v760 = vpop.f32.mrb[0].mxu0
      %v761 = vadd.f32 0.0, %v760
      %v762 = vpop.f32.mrb[0].mxu0
      %763 = vmatprep.mubr.f32.mxu0 0.0
      %764 = vmatmul.mubr.f32.gmra.mrb[0].mxu0 %v574
      %v765 = vpop.f32.mrb[0].mxu0
      %v766 = vadd.f32 0.0, %v765
      %v767 = vpop.f32.mrb[0].mxu0
      %768 = vmatprep.mubr.f32.mxu0 0.0
      %769 = vmatmul.mubr.f32.gmra.mrb[0].mxu0 %v577
      %v770 = vpop.f32.mrb[0].mxu0
      %v771 = vadd.f32 0.0, %v770
      %v772 = vpop.f32.mrb[0].mxu0
      %773 = vmatprep.mubr.f32.mxu0 0.0
      %774 = vmatmul.mubr.f32.gmra.mrb[0].mxu0 %v580
      %v775 = vpop.f32.mrb[0].mxu0
      %v776 = vadd.f32 0.0, %v775
      %v777 = vpop.f32.mrb[0].mxu0
      %778 = vmatprep.mubr.f32.mxu0 0.0
      %779 = vmatmul.mubr.f32.gmra.mrb[0].mxu0 %v583
      %v780 = vpop.f32.mrb[0].mxu0
      %v781 = vadd.f32 0.0, %v780
      %v782 = vpop.f32.mrb[0].mxu0
      %783 = vmatprep.mubr.f32.mxu0 0.0
      %784 = vmatmul.mubr.f32.gmra.mrb[0].mxu0 %v586
      %v785 = vpop.f32.mrb[0].mxu0
      %v786 = vadd.f32 0.0, %v785
      %v787 = vpop.f32.mrb[0].mxu0
      %788 = vmatprep.mubr.f32.mxu0 0.0
      %789 = vmatmul.mubr.f32.gmra.mrb[0].mxu0 %v589
      %v790 = vpop.f32.mrb[0].mxu0
      %v791 = vadd.f32 0.0, %v790
      %v792 = vpop.f32.mrb[0].mxu0
      %793 = vmatprep.mubr.f32.mxu0 0.0
      %794 = vmatmul.mubr.f32.gmra.mrb[0].mxu0 %v592
      %v795 = vpop.f32.mrb[0].mxu0
      %v796 = vadd.f32 0.0, %v795
      %v797 = vpop.f32.mrb[0].mxu0
      %798 = vmatprep.mubr.f32.mxu0 0.0
      %799 = vmatmul.mubr.f32.gmra.mrb[0].mxu0 %v595
      %v800 = vpop.f32.mrb[0].mxu0
      %v801 = vadd.f32 0.0, %v800
      %v802 = vpop.f32.mrb[0].mxu0
      %803 = vmatprep.mubr.f32.mxu0 0.0
      %804 = vmatmul.mubr.f32.gmra.mrb[0].mxu0 %v598
      %v805 = vpop.f32.mrb[0].mxu0
      %v806 = vadd.f32 0.0, %v805
      %v807 = vpop.f32.mrb[0].mxu0
      %808 = vmatprep.mubr.f32.mxu0 0.0
      %809 = vmatmul.mubr.f32.gmra.mrb[0].mxu0 %v601
      %v810 = vpop.f32.mrb[0].mxu0
      %v811 = vadd.f32 0.0, %v810
      %v812 = vpop.f32.mrb[0].mxu0
      %813 = vmatprep.mubr.f32.mxu0 0.0
      %814 = vmatmul.mubr.f32.gmra.mrb[0].mxu0 %v604
      %v815 = vpop.f32.mrb[0].mxu0
      %v816 = vadd.f32 0.0, %v815
      %v817 = vpop.f32.mrb[0].mxu0
      %818 = vmatprep.mubr.f32.mxu0 0.0
      %819 = vmatmul.mubr.f32.gmra.mrb[0].mxu0 %v607
      %v820 = vpop.f32.mrb[0].mxu0
      %v821 = vadd.f32 0.0, %v820
      %v822 = vpop.f32.mrb[0].mxu0
      %823 = vmatprep.mubr.f32.mxu0 0.0
      %824 = vmatmul.mubr.f32.gmra.mrb[0].mxu0 %v610
      %v825 = vpop.f32.mrb[0].mxu0
      %v826 = vadd.f32 0.0, %v825
      %v827 = vpop.f32.mrb[0].mxu0
      %828 = vmatprep.mubr.f32.mxu0 0.0
      %829 = vmatmul.mubr.f32.gmra.mrb[0].mxu0 %v613
      %v830 = vpop.f32.mrb[0].mxu0
      %v831 = vadd.f32 0.0, %v830
      %v832 = vpop.f32.mrb[0].mxu0
      %833 = vmatprep.mubr.f32.mxu0 0.0
      %834 = vmatmul.mubr.f32.gmra.mrb[0].mxu0 %v616
      %v835 = vpop.f32.mrb[0].mxu0
      %v836 = vadd.f32 0.0, %v835
      %v837 = vpop.f32.mrb[0].mxu0
      %838 = vmatprep.mubr.f32.mxu0 0.0
      %839 = vmatmul.mubr.f32.gmra.mrb[0].mxu0 %v619
      %v840 = vpop.f32.mrb[0].mxu0
      %v841 = vadd.f32 0.0, %v840
      %v842 = vpop.f32.mrb[0].mxu0
      %843 = vmatprep.mubr.f32.mxu0 0.0
      %844 = vmatmul.mubr.f32.gmra.mrb[0].mxu0 %v622
      %v845 = vpop.f32.mrb[0].mxu0
      %v846 = vadd.f32 0.0, %v845
      %v847 = vpop.f32.mrb[0].mxu0
      %848 = vmatprep.mubr.f32.mxu0 0.0
      %849 = vmatmul.mubr.f32.gmra.mrb[0].mxu0 %v625
      %v850 = vpop.f32.mrb[0].mxu0
      %v851 = vadd.f32 0.0, %v850
      %v852 = vpop.f32.mrb[0].mxu0
      %853 = vmatprep.mubr.f32.mxu0 0.0
      %854 = vmatmul.mubr.f32.gmra.mrb[0].mxu0 %v628
      %v855 = vpop.f32.mrb[0].mxu0
      %v856 = vadd.f32 0.0, %v855
      %v857 = vpop.f32.mrb[0].mxu0
      %858 = vdwg.mxu0
      %p859 = scmp.gt.s32.totalorder %s25, 0
      %s860 = scalar_select %p859, 1, 0
      %s861 = scvt.s32.f32 %s860
      %p862 = scmp.lt.s32.totalorder %s25, 0
      %s863 = scalar_select %p862, 1, 0
      %s864 = scvt.s32.f32 %s863
      %v865 = vld [vmem:[%s466] sm:$0xff]
      %v866 = vld [vmem:[%s466 + $0x8] sm:$0xff]
      %v868 = vsel %vm533, %v865, 0
      %v871 = vsel %vm533, %v866, 0
      %873 = vmatprep.subr.mxu0 0.0
      %874 = vmatpush1.msra.mxu0 %v632
      %875 = vmatprep.subr.mxu0 0.0
      %876 = vmatpush1.msra.mxu0 0.0
      %877 = vmatprep.subr.mxu0 0.0
      %878 = vmatpush1.msra.mxu0 0.0
      %879 = vmatprep.subr.mxu0 0.0
      %880 = vmatpush1.msra.mxu0 0.0
      %881 = vmatprep.subr.mxu0 0.0
      %882 = vmatpush1.msra.mxu0 0.0
      %883 = vmatprep.subr.mxu0 0.0
      %884 = vmatpush1.msra.mxu0 0.0
      %885 = vmatprep.subr.mxu0 0.0
      %886 = vmatpush1.msra.mxu0 0.0
      %887 = vmatprep.subr.mxu0 0.0
      %888 = vmatpush1.msra.mxu0 0.0
      %889 = vmatprep.subr.mxu0 0.0
      %890 = vmatpush1.msra.mxu0 0.0
      %891 = vmatprep.subr.mxu0 0.0
      %892 = vmatpush1.msra.mxu0 0.0
      %893 = vmatprep.subr.mxu0 0.0
      %894 = vmatpush1.msra.mxu0 0.0
      %895 = vmatprep.subr.mxu0 0.0
      %896 = vmatpush1.msra.mxu0 0.0
      %897 = vmatprep.subr.mxu0 0.0
      %898 = vmatpush1.msra.mxu0 0.0
      %899 = vmatprep.subr.mxu0 0.0
      %900 = vmatpush1.msra.mxu0 0.0
      %901 = vmatprep.subr.mxu0 0.0
      %902 = vmatpush1.msra.mxu0 0.0
      %903 = vmatprep.subr.mxu0 0.0
      %904 = vmatpush1.msra.mxu0 0.0
      %905 = vmatprep.subr.mxu0 0.0
      %906 = vmatpush1.msra.mxu0 0.0
      %907 = vmatprep.subr.mxu0 0.0
      %908 = vmatpush1.msra.mxu0 0.0
      %909 = vmatprep.subr.mxu0 0.0
      %910 = vmatpush1.msra.mxu0 0.0
      %911 = vmatprep.subr.mxu0 0.0
      %912 = vmatpush1.msra.mxu0 0.0
      %913 = vmatprep.subr.mxu0 0.0
      %914 = vmatpush1.msra.mxu0 0.0
      %915 = vmatprep.subr.mxu0 0.0
      %916 = vmatpush1.msra.mxu0 0.0
      %917 = vmatprep.subr.mxu0 0.0
      %918 = vmatpush1.msra.mxu0 0.0
      %919 = vmatprep.subr.mxu0 0.0
      %920 = vmatpush1.msra.mxu0 0.0
      %921 = vmatprep.subr.mxu0 0.0
      %922 = vmatpush1.msra.mxu0 0.0
      %923 = vmatprep.subr.mxu0 0.0
      %924 = vmatpush1.msra.mxu0 0.0
      %925 = vmatprep.subr.mxu0 0.0
      %926 = vmatpush1.msra.mxu0 0.0
      %927 = vmatprep.subr.mxu0 0.0
      %928 = vmatpush1.msra.mxu0 0.0
      %929 = vmatprep.subr.mxu0 0.0
      %930 = vmatpush1.msra.mxu0 0.0
      %931 = vmatprep.subr.mxu0 0.0
      %932 = vmatpush1.msra.mxu0 0.0
      %933 = vmatprep.subr.mxu0 0.0
      %934 = vmatpush1.msra.mxu0 0.0
      %935 = vmatprep.subr.mxu0 0.0
      %936 = vmatpush1.msra.mxu0 0.0
      %937 = vmatprep.mubr.f32.mxu0 0.0
      %938 = vmatmul.mubr.f32.gmra.mrb[0].mxu0 %v868
      %v939 = vpop.f32.mrb[0].mxu0
      %v940 = vadd.f32 0.0, %v939
      %v941 = vpop.f32.mrb[0].mxu0
      %942 = vmatprep.mubr.f32.mxu0 0.0
      %943 = vmatmul.mubr.f32.gmra.mrb[0].mxu0 %v871
      %v944 = vpop.f32.mrb[0].mxu0
      %v945 = vadd.f32 0.0, %v944
      %v946 = vpop.f32.mrb[0].mxu0
      %947 = vdwg.mxu0
      %v948 = vstv %s861
      %v949 = vmul.f32 %v940, %v948
      %v950 = vmul.f32 %v945, %v948
      %v951 = vld [vmem:[%s484] sm:$0xff]
      %v952 = vld [vmem:[%s484 + $0x8] sm:$0xff]
      %v954 = vsel %vm533, %v951, 0
      %v957 = vsel %vm533, %v952, 0
      %959 = vmatprep.subr.mxu0 0.0
      %960 = vmatpush1.msra.mxu0 %v632
      %961 = vmatprep.subr.mxu0 0.0
      %962 = vmatpush1.msra.mxu0 0.0
      %963 = vmatprep.subr.mxu0 0.0
      %964 = vmatpush1.msra.mxu0 0.0
      %965 = vmatprep.subr.mxu0 0.0
      %966 = vmatpush1.msra.mxu0 0.0
      %967 = vmatprep.subr.mxu0 0.0
      %968 = vmatpush1.msra.mxu0 0.0
      %969 = vmatprep.subr.mxu0 0.0
      %970 = vmatpush1.msra.mxu0 0.0
      %971 = vmatprep.subr.mxu0 0.0
      %972 = vmatpush1.msra.mxu0 0.0
      %973 = vmatprep.subr.mxu0 0.0
      %974 = vmatpush1.msra.mxu0 0.0
      %975 = vmatprep.subr.mxu0 0.0
      %976 = vmatpush1.msra.mxu0 0.0
      %977 = vmatprep.subr.mxu0 0.0
      %978 = vmatpush1.msra.mxu0 0.0
      %979 = vmatprep.subr.mxu0 0.0
      %980 = vmatpush1.msra.mxu0 0.0
      %981 = vmatprep.subr.mxu0 0.0
      %982 = vmatpush1.msra.mxu0 0.0
      %983 = vmatprep.subr.mxu0 0.0
      %984 = vmatpush1.msra.mxu0 0.0
      %985 = vmatprep.subr.mxu0 0.0
      %986 = vmatpush1.msra.mxu0 0.0
      %987 = vmatprep.subr.mxu0 0.0
      %988 = vmatpush1.msra.mxu0 0.0
      %989 = vmatprep.subr.mxu0 0.0
      %990 = vmatpush1.msra.mxu0 0.0
      %991 = vmatprep.subr.mxu0 0.0
      %992 = vmatpush1.msra.mxu0 0.0
      %993 = vmatprep.subr.mxu0 0.0
      %994 = vmatpush1.msra.mxu0 0.0
      %995 = vmatprep.subr.mxu0 0.0
      %996 = vmatpush1.msra.mxu0 0.0
      %997 = vmatprep.subr.mxu0 0.0
      %998 = vmatpush1.msra.mxu0 0.0
      %999 = vmatprep.subr.mxu0 0.0
      %1000 = vmatpush1.msra.mxu0 0.0
      %1001 = vmatprep.subr.mxu0 0.0
      %1002 = vmatpush1.msra.mxu0 0.0
      %1003 = vmatprep.subr.mxu0 0.0
      %1004 = vmatpush1.msra.mxu0 0.0
      %1005 = vmatprep.subr.mxu0 0.0
      %1006 = vmatpush1.msra.mxu0 0.0
      %1007 = vmatprep.subr.mxu0 0.0
      %1008 = vmatpush1.msra.mxu0 0.0
      %1009 = vmatprep.subr.mxu0 0.0
      %1010 = vmatpush1.msra.mxu0 0.0
      %1011 = vmatprep.subr.mxu0 0.0
      %1012 = vmatpush1.msra.mxu0 0.0
      %1013 = vmatprep.subr.mxu0 0.0
      %1014 = vmatpush1.msra.mxu0 0.0
      %1015 = vmatprep.subr.mxu0 0.0
      %1016 = vmatpush1.msra.mxu0 0.0
      %1017 = vmatprep.subr.mxu0 0.0
      %1018 = vmatpush1.msra.mxu0 0.0
      %1019 = vmatprep.subr.mxu0 0.0
      %1020 = vmatpush1.msra.mxu0 0.0
      %1021 = vmatprep.subr.mxu0 0.0
      %1022 = vmatpush1.msra.mxu0 0.0
      %1023 = vmatprep.mubr.f32.mxu0 0.0
      %1024 = vmatmul.mubr.f32.gmra.mrb[0].mxu0 %v954
      %v1025 = vpop.f32.mrb[0].mxu0
      %v1026 = vadd.f32 0.0, %v1025
      %v1027 = vpop.f32.mrb[0].mxu0
      %1028 = vmatprep.mubr.f32.mxu0 0.0
      %1029 = vmatmul.mubr.f32.gmra.mrb[0].mxu0 %v957
      %v1030 = vpop.f32.mrb[0].mxu0
      %v1031 = vadd.f32 0.0, %v1030
      %v1032 = vpop.f32.mrb[0].mxu0
      %1033 = vdwg.mxu0
      %v1034 = vstv %s864
      %v1035 = vmul.f32 %v1026, %v1034
      %v1036 = vmul.f32 %v1031, %v1034
      %1037 = vst [vmem:[#allocation2] sm:$0xff] %v949
      %1038 = vst [vmem:[#allocation2 + $0x8] sm:$0xff] %v950
      %1039 = vst [vmem:[#allocation2 + $0x10] sm:$0xff] %v701
      %1040 = vst [vmem:[#allocation2 + $0x18] sm:$0xff] %v706
      %1041 = vst [vmem:[#allocation2 + $0x20] sm:$0xff] %v711
      %1042 = vst [vmem:[#allocation2 + $0x28] sm:$0xff] %v716
      %1043 = vst [vmem:[#allocation2 + $0x30] sm:$0xff] %v721
      %1044 = vst [vmem:[#allocation2 + $0x38] sm:$0xff] %v726
      %1045 = vst [vmem:[#allocation2 + $0x40] sm:$0xff] %v731
      %1046 = vst [vmem:[#allocation2 + $0x48] sm:$0xff] %v736
      %1047 = vst [vmem:[#allocation2 + $0x50] sm:$0xff] %v741
      %1048 = vst [vmem:[#allocation2 + $0x58] sm:$0xff] %v746
      %1049 = vst [vmem:[#allocation2 + $0x60] sm:$0xff] %v751
      %1050 = vst [vmem:[#allocation2 + $0x68] sm:$0xff] %v756
      %1051 = vst [vmem:[#allocation2 + $0x70] sm:$0xff] %v761
      %1052 = vst [vmem:[#allocation2 + $0x78] sm:$0xff] %v766
      %1053 = vst [vmem:[#allocation2 + $0x80] sm:$0xff] %v771
      %1054 = vst [vmem:[#allocation2 + $0x88] sm:$0xff] %v776
      %1055 = vst [vmem:[#allocation2 + $0x90] sm:$0xff] %v781
      %1056 = vst [vmem:[#allocation2 + $0x98] sm:$0xff] %v786
      %1057 = vst [vmem:[#allocation2 + $0xa0] sm:$0xff] %v791
      %1058 = vst [vmem:[#allocation2 + $0xa8] sm:$0xff] %v796
      %1059 = vst [vmem:[#allocation2 + $0xb0] sm:$0xff] %v801
      %1060 = vst [vmem:[#allocation2 + $0xb8] sm:$0xff] %v806
      %1061 = vst [vmem:[#allocation2 + $0xc0] sm:$0xff] %v811
      %1062 = vst [vmem:[#allocation2 + $0xc8] sm:$0xff] %v816
      %1063 = vst [vmem:[#allocation2 + $0xd0] sm:$0xff] %v821
      %1064 = vst [vmem:[#allocation2 + $0xd8] sm:$0xff] %v826
      %1065 = vst [vmem:[#allocation2 + $0xe0] sm:$0xff] %v831
      %1066 = vst [vmem:[#allocation2 + $0xe8] sm:$0xff] %v836
      %1067 = vst [vmem:[#allocation2 + $0xf0] sm:$0xff] %v841
      %1068 = vst [vmem:[#allocation2 + $0xf8] sm:$0xff] %v846
      %1069 = vst [vmem:[#allocation2 + $0x100] sm:$0xff] %v851
      %1070 = vst [vmem:[#allocation2 + $0x108] sm:$0xff] %v856
      %1071 = vst [vmem:[#allocation2 + $0x110] sm:$0xff] %v1035
      %1072 = vst [vmem:[#allocation2 + $0x118] sm:$0xff] %v1036
      %v1073 = vld [vmem:[#allocation2] sm:$0xff]
      %v1074 = vld [vmem:[#allocation2 + $0x8] sm:$0xff]
      %v1075 = vld [vmem:[#allocation2 + $0x10] sm:$0xff]
      %v1076 = vld [vmem:[#allocation2 + $0x18] sm:$0xff]
      %v1077 = vld [vmem:[#allocation2 + $0x20] sm:$0xff]
      %v1078 = vld [vmem:[#allocation2 + $0x28] sm:$0xff]
      %v1079 = vld [vmem:[#allocation2 + $0x30] sm:$0xff]
      %v1080 = vld [vmem:[#allocation2 + $0x38] sm:$0xff]
      %v1081 = vld [vmem:[#allocation2 + $0x40] sm:$0xff]
      %v1082 = vld [vmem:[#allocation2 + $0x48] sm:$0xff]
      %v1083 = vld [vmem:[#allocation2 + $0x50] sm:$0xff]
      %v1084 = vld [vmem:[#allocation2 + $0x58] sm:$0xff]
      %v1085 = vld [vmem:[#allocation2 + $0x60] sm:$0xff]
      %v1086 = vld [vmem:[#allocation2 + $0x68] sm:$0xff]
      %v1087 = vld [vmem:[#allocation2 + $0x70] sm:$0xff]
      %v1088 = vld [vmem:[#allocation2 + $0x78] sm:$0xff]
      %v1089 = vld [vmem:[#allocation2 + $0x80] sm:$0xff]
      %v1090 = vld [vmem:[#allocation2 + $0x88] sm:$0xff]
      %v1091 = vld [vmem:[#allocation2 + $0x90] sm:$0xff]
      %v1092 = vld [vmem:[#allocation2 + $0x98] sm:$0xff]
      %v1093 = vld [vmem:[#allocation2 + $0xa0] sm:$0xff]
      %v1094 = vld [vmem:[#allocation2 + $0xa8] sm:$0xff]
      %v1095 = vld [vmem:[#allocation2 + $0xb0] sm:$0xff]
      %v1096 = vld [vmem:[#allocation2 + $0xb8] sm:$0xff]
      %v1097 = vld [vmem:[#allocation2 + $0xc0] sm:$0xff]
      %v1098 = vld [vmem:[#allocation2 + $0xc8] sm:$0xff]
      %v1099 = vld [vmem:[#allocation2 + $0xd0] sm:$0xff]
      %v1100 = vld [vmem:[#allocation2 + $0xd8] sm:$0xff]
      %v1101 = vld [vmem:[#allocation2 + $0xe0] sm:$0xff]
      %v1102 = vld [vmem:[#allocation2 + $0xe8] sm:$0xff]
      %v1103 = vld [vmem:[#allocation2 + $0xf0] sm:$0xff]
      %v1104 = vld [vmem:[#allocation2 + $0xf8] sm:$0xff]
      %v1105 = vld [vmem:[#allocation2 + $0x20] sm:$0xff]
      %v1106 = vld [vmem:[#allocation2 + $0x28] sm:$0xff]
      %v1107 = vld [vmem:[#allocation2 + $0x30] sm:$0xff]
      %v1108 = vld [vmem:[#allocation2 + $0x38] sm:$0xff]
      %v1109 = vld [vmem:[#allocation2 + $0x40] sm:$0xff]
      %v1110 = vld [vmem:[#allocation2 + $0x48] sm:$0xff]
      %v1111 = vld [vmem:[#allocation2 + $0x50] sm:$0xff]
      %v1112 = vld [vmem:[#allocation2 + $0x58] sm:$0xff]
      %v1113 = vld [vmem:[#allocation2 + $0x60] sm:$0xff]
      %v1114 = vld [vmem:[#allocation2 + $0x68] sm:$0xff]
      %v1115 = vld [vmem:[#allocation2 + $0x70] sm:$0xff]
      %v1116 = vld [vmem:[#allocation2 + $0x78] sm:$0xff]
      %v1117 = vld [vmem:[#allocation2 + $0x80] sm:$0xff]
      %v1118 = vld [vmem:[#allocation2 + $0x88] sm:$0xff]
      %v1119 = vld [vmem:[#allocation2 + $0x90] sm:$0xff]
      %v1120 = vld [vmem:[#allocation2 + $0x98] sm:$0xff]
      %v1121 = vld [vmem:[#allocation2 + $0xa0] sm:$0xff]
      %v1122 = vld [vmem:[#allocation2 + $0xa8] sm:$0xff]
      %v1123 = vld [vmem:[#allocation2 + $0xb0] sm:$0xff]
      %v1124 = vld [vmem:[#allocation2 + $0xb8] sm:$0xff]
      %v1125 = vld [vmem:[#allocation2 + $0xc0] sm:$0xff]
      %v1126 = vld [vmem:[#allocation2 + $0xc8] sm:$0xff]
      %v1127 = vld [vmem:[#allocation2 + $0xd0] sm:$0xff]
      %v1128 = vld [vmem:[#allocation2 + $0xd8] sm:$0xff]
      %v1129 = vld [vmem:[#allocation2 + $0xe0] sm:$0xff]
      %v1130 = vld [vmem:[#allocation2 + $0xe8] sm:$0xff]
      %v1131 = vld [vmem:[#allocation2 + $0xf0] sm:$0xff]
      %v1132 = vld [vmem:[#allocation2 + $0xf8] sm:$0xff]
      %v1133 = vld [vmem:[#allocation2 + $0x100] sm:$0xff]
      %v1134 = vld [vmem:[#allocation2 + $0x108] sm:$0xff]
      %v1135 = vld [vmem:[#allocation2 + $0x110] sm:$0xff]
      %v1136 = vld [vmem:[#allocation2 + $0x118] sm:$0xff]
      %v1137 = vld [vmem:[%s4] sm:$0x1]
      %v1138 = vlaneseq
      %v1139 = vshrl.u32 %v1138, 7
      %v1140 = vsub.s32 0, %v1139
      %v1141 = vrot.slane %v1137, %v1140
      %v1142 = vmul.f32 %v1073, %v1141
      %v1143 = vmul.f32 %v1074, %v1141
      %v1144 = vmul.f32 %v1075, %v1141
      %v1145 = vmul.f32 %v1076, %v1141
      %v1146 = vmul.f32 %v1077, %v1141
      %v1147 = vmul.f32 %v1078, %v1141
      %v1148 = vmul.f32 %v1079, %v1141
      %v1149 = vmul.f32 %v1080, %v1141
      %v1150 = vmul.f32 %v1081, %v1141
      %v1151 = vmul.f32 %v1082, %v1141
      %v1152 = vmul.f32 %v1083, %v1141
      %v1153 = vmul.f32 %v1084, %v1141
      %v1154 = vmul.f32 %v1085, %v1141
      %v1155 = vmul.f32 %v1086, %v1141
      %v1156 = vmul.f32 %v1087, %v1141
      %v1157 = vmul.f32 %v1088, %v1141
      %v1158 = vmul.f32 %v1089, %v1141
      %v1159 = vmul.f32 %v1090, %v1141
      %v1160 = vmul.f32 %v1091, %v1141
      %v1161 = vmul.f32 %v1092, %v1141
      %v1162 = vmul.f32 %v1093, %v1141
      %v1163 = vmul.f32 %v1094, %v1141
      %v1164 = vmul.f32 %v1095, %v1141
      %v1165 = vmul.f32 %v1096, %v1141
      %v1166 = vmul.f32 %v1097, %v1141
      %v1167 = vmul.f32 %v1098, %v1141
      %v1168 = vmul.f32 %v1099, %v1141
      %v1169 = vmul.f32 %v1100, %v1141
      %v1170 = vmul.f32 %v1101, %v1141
      %v1171 = vmul.f32 %v1102, %v1141
      %v1172 = vmul.f32 %v1103, %v1141
      %v1173 = vmul.f32 %v1104, %v1141
      %v1174 = vld [vmem:[%s4 + $0x3] sm:$0x1]
      %v1175 = vlaneseq
      %v1176 = vshrl.u32 %v1175, 7
      %v1177 = vsub.s32 0, %v1176
      %v1178 = vrot.slane %v1174, %v1177
      %v1179 = vmul.f32 %v701, %v1178
      %v1180 = vmul.f32 %v706, %v1178
      %v1181 = vmul.f32 %v711, %v1178
      %v1182 = vmul.f32 %v716, %v1178
      %v1183 = vmul.f32 %v721, %v1178
      %v1184 = vmul.f32 %v726, %v1178
      %v1185 = vmul.f32 %v731, %v1178
      %v1186 = vmul.f32 %v736, %v1178
      %v1187 = vmul.f32 %v741, %v1178
      %v1188 = vmul.f32 %v746, %v1178
      %v1189 = vmul.f32 %v751, %v1178
      %v1190 = vmul.f32 %v756, %v1178
      %v1191 = vmul.f32 %v761, %v1178
      %v1192 = vmul.f32 %v766, %v1178
      %v1193 = vmul.f32 %v771, %v1178
      %v1194 = vmul.f32 %v776, %v1178
      %v1195 = vmul.f32 %v781, %v1178
      %v1196 = vmul.f32 %v786, %v1178
      %v1197 = vmul.f32 %v791, %v1178
      %v1198 = vmul.f32 %v796, %v1178
      %v1199 = vmul.f32 %v801, %v1178
      %v1200 = vmul.f32 %v806, %v1178
      %v1201 = vmul.f32 %v811, %v1178
      %v1202 = vmul.f32 %v816, %v1178
      %v1203 = vmul.f32 %v821, %v1178
      %v1204 = vmul.f32 %v826, %v1178
      %v1205 = vmul.f32 %v831, %v1178
      %v1206 = vmul.f32 %v836, %v1178
      %v1207 = vmul.f32 %v841, %v1178
      %v1208 = vmul.f32 %v846, %v1178
      %v1209 = vmul.f32 %v851, %v1178
      %v1210 = vmul.f32 %v856, %v1178
      %v1211 = vadd.f32 %v1142, %v1179
      %v1212 = vadd.f32 %v1143, %v1180
      %v1213 = vadd.f32 %v1144, %v1181
      %v1214 = vadd.f32 %v1145, %v1182
      %v1215 = vadd.f32 %v1146, %v1183
      %v1216 = vadd.f32 %v1147, %v1184
      %v1217 = vadd.f32 %v1148, %v1185
      %v1218 = vadd.f32 %v1149, %v1186
      %v1219 = vadd.f32 %v1150, %v1187
      %v1220 = vadd.f32 %v1151, %v1188
      %v1221 = vadd.f32 %v1152, %v1189
      %v1222 = vadd.f32 %v1153, %v1190
      %v1223 = vadd.f32 %v1154, %v1191
      %v1224 = vadd.f32 %v1155, %v1192
      %v1225 = vadd.f32 %v1156, %v1193
      %v1226 = vadd.f32 %v1157, %v1194
      %v1227 = vadd.f32 %v1158, %v1195
      %v1228 = vadd.f32 %v1159, %v1196
      %v1229 = vadd.f32 %v1160, %v1197
      %v1230 = vadd.f32 %v1161, %v1198
      %v1231 = vadd.f32 %v1162, %v1199
      %v1232 = vadd.f32 %v1163, %v1200
      %v1233 = vadd.f32 %v1164, %v1201
      %v1234 = vadd.f32 %v1165, %v1202
      %v1235 = vadd.f32 %v1166, %v1203
      %v1236 = vadd.f32 %v1167, %v1204
      %v1237 = vadd.f32 %v1168, %v1205
      %v1238 = vadd.f32 %v1169, %v1206
      %v1239 = vadd.f32 %v1170, %v1207
      %v1240 = vadd.f32 %v1171, %v1208
      %v1241 = vadd.f32 %v1172, %v1209
      %v1242 = vadd.f32 %v1173, %v1210
      %v1243 = vld [vmem:[%s4 + $0x6] sm:$0x1]
      %v1244 = vlaneseq
      %v1245 = vshrl.u32 %v1244, 7
      %v1246 = vsub.s32 0, %v1245
      %v1247 = vrot.slane %v1243, %v1246
      %v1248 = vmul.f32 %v1105, %v1247
      %v1249 = vmul.f32 %v1106, %v1247
      %v1250 = vmul.f32 %v1107, %v1247
      %v1251 = vmul.f32 %v1108, %v1247
      %v1252 = vmul.f32 %v1109, %v1247
      %v1253 = vmul.f32 %v1110, %v1247
      %v1254 = vmul.f32 %v1111, %v1247
      %v1255 = vmul.f32 %v1112, %v1247
      %v1256 = vmul.f32 %v1113, %v1247
      %v1257 = vmul.f32 %v1114, %v1247
      %v1258 = vmul.f32 %v1115, %v1247
      %v1259 = vmul.f32 %v1116, %v1247
      %v1260 = vmul.f32 %v1117, %v1247
      %v1261 = vmul.f32 %v1118, %v1247
      %v1262 = vmul.f32 %v1119, %v1247
      %v1263 = vmul.f32 %v1120, %v1247
      %v1264 = vmul.f32 %v1121, %v1247
      %v1265 = vmul.f32 %v1122, %v1247
      %v1266 = vmul.f32 %v1123, %v1247
      %v1267 = vmul.f32 %v1124, %v1247
      %v1268 = vmul.f32 %v1125, %v1247
      %v1269 = vmul.f32 %v1126, %v1247
      %v1270 = vmul.f32 %v1127, %v1247
      %v1271 = vmul.f32 %v1128, %v1247
      %v1272 = vmul.f32 %v1129, %v1247
      %v1273 = vmul.f32 %v1130, %v1247
      %v1274 = vmul.f32 %v1131, %v1247
      %v1275 = vmul.f32 %v1132, %v1247
      %v1276 = vmul.f32 %v1133, %v1247
      %v1277 = vmul.f32 %v1134, %v1247
      %v1278 = vmul.f32 %v1135, %v1247
      %v1279 = vmul.f32 %v1136, %v1247
      %v1280 = vadd.f32 %v1211, %v1248
      %v1281 = vadd.f32 %v1212, %v1249
      %v1282 = vadd.f32 %v1213, %v1250
      %v1283 = vadd.f32 %v1214, %v1251
      %v1284 = vadd.f32 %v1215, %v1252
      %v1285 = vadd.f32 %v1216, %v1253
      %v1286 = vadd.f32 %v1217, %v1254
      %v1287 = vadd.f32 %v1218, %v1255
      %v1288 = vadd.f32 %v1219, %v1256
      %v1289 = vadd.f32 %v1220, %v1257
      %v1290 = vadd.f32 %v1221, %v1258
      %v1291 = vadd.f32 %v1222, %v1259
      %v1292 = vadd.f32 %v1223, %v1260
      %v1293 = vadd.f32 %v1224, %v1261
      %v1294 = vadd.f32 %v1225, %v1262
      %v1295 = vadd.f32 %v1226, %v1263
      %v1296 = vadd.f32 %v1227, %v1264
      %v1297 = vadd.f32 %v1228, %v1265
      %v1298 = vadd.f32 %v1229, %v1266
      %v1299 = vadd.f32 %v1230, %v1267
      %v1300 = vadd.f32 %v1231, %v1268
      %v1301 = vadd.f32 %v1232, %v1269
      %v1302 = vadd.f32 %v1233, %v1270
      %v1303 = vadd.f32 %v1234, %v1271
      %v1304 = vadd.f32 %v1235, %v1272
      %v1305 = vadd.f32 %v1236, %v1273
      %v1306 = vadd.f32 %v1237, %v1274
      %v1307 = vadd.f32 %v1238, %v1275
      %v1308 = vadd.f32 %v1239, %v1276
      %v1309 = vadd.f32 %v1240, %v1277
      %v1310 = vadd.f32 %v1241, %v1278
      %v1311 = vadd.f32 %v1242, %v1279
      %v1312 = vld [vmem:[%s4 + $0x1] sm:$0x1]
      %v1313 = vlaneseq
      %v1314 = vshrl.u32 %v1313, 7
      %v1315 = vsub.s32 0, %v1314
      %v1316 = vrot.slane %v1312, %v1315
      %v1317 = vmul.f32 %v1073, %v1316
      %v1318 = vmul.f32 %v1074, %v1316
      %v1319 = vmul.f32 %v1075, %v1316
      %v1320 = vmul.f32 %v1076, %v1316
      %v1321 = vmul.f32 %v1077, %v1316
      %v1322 = vmul.f32 %v1078, %v1316
      %v1323 = vmul.f32 %v1079, %v1316
      %v1324 = vmul.f32 %v1080, %v1316
      %v1325 = vmul.f32 %v1081, %v1316
      %v1326 = vmul.f32 %v1082, %v1316
      %v1327 = vmul.f32 %v1083, %v1316
      %v1328 = vmul.f32 %v1084, %v1316
      %v1329 = vmul.f32 %v1085, %v1316
      %v1330 = vmul.f32 %v1086, %v1316
      %v1331 = vmul.f32 %v1087, %v1316
      %v1332 = vmul.f32 %v1088, %v1316
      %v1333 = vmul.f32 %v1089, %v1316
      %v1334 = vmul.f32 %v1090, %v1316
      %v1335 = vmul.f32 %v1091, %v1316
      %v1336 = vmul.f32 %v1092, %v1316
      %v1337 = vmul.f32 %v1093, %v1316
      %v1338 = vmul.f32 %v1094, %v1316
      %v1339 = vmul.f32 %v1095, %v1316
      %v1340 = vmul.f32 %v1096, %v1316
      %v1341 = vmul.f32 %v1097, %v1316
      %v1342 = vmul.f32 %v1098, %v1316
      %v1343 = vmul.f32 %v1099, %v1316
      %v1344 = vmul.f32 %v1100, %v1316
      %v1345 = vmul.f32 %v1101, %v1316
      %v1346 = vmul.f32 %v1102, %v1316
      %v1347 = vmul.f32 %v1103, %v1316
      %v1348 = vmul.f32 %v1104, %v1316
      %v1349 = vld [vmem:[%s4 + $0x4] sm:$0x1]
      %v1350 = vlaneseq
      %v1351 = vshrl.u32 %v1350, 7
      %v1352 = vsub.s32 0, %v1351
      %v1353 = vrot.slane %v1349, %v1352
      %v1354 = vmul.f32 %v701, %v1353
      %v1355 = vmul.f32 %v706, %v1353
      %v1356 = vmul.f32 %v711, %v1353
      %v1357 = vmul.f32 %v716, %v1353
      %v1358 = vmul.f32 %v721, %v1353
      %v1359 = vmul.f32 %v726, %v1353
      %v1360 = vmul.f32 %v731, %v1353
      %v1361 = vmul.f32 %v736, %v1353
      %v1362 = vmul.f32 %v741, %v1353
      %v1363 = vmul.f32 %v746, %v1353
      %v1364 = vmul.f32 %v751, %v1353
      %v1365 = vmul.f32 %v756, %v1353
      %v1366 = vmul.f32 %v761, %v1353
      %v1367 = vmul.f32 %v766, %v1353
      %v1368 = vmul.f32 %v771, %v1353
      %v1369 = vmul.f32 %v776, %v1353
      %v1370 = vmul.f32 %v781, %v1353
      %v1371 = vmul.f32 %v786, %v1353
      %v1372 = vmul.f32 %v791, %v1353
      %v1373 = vmul.f32 %v796, %v1353
      %v1374 = vmul.f32 %v801, %v1353
      %v1375 = vmul.f32 %v806, %v1353
      %v1376 = vmul.f32 %v811, %v1353
      %v1377 = vmul.f32 %v816, %v1353
      %v1378 = vmul.f32 %v821, %v1353
      %v1379 = vmul.f32 %v826, %v1353
      %v1380 = vmul.f32 %v831, %v1353
      %v1381 = vmul.f32 %v836, %v1353
      %v1382 = vmul.f32 %v841, %v1353
      %v1383 = vmul.f32 %v846, %v1353
      %v1384 = vmul.f32 %v851, %v1353
      %v1385 = vmul.f32 %v856, %v1353
      %v1386 = vadd.f32 %v1317, %v1354
      %v1387 = vadd.f32 %v1318, %v1355
      %v1388 = vadd.f32 %v1319, %v1356
      %v1389 = vadd.f32 %v1320, %v1357
      %v1390 = vadd.f32 %v1321, %v1358
      %v1391 = vadd.f32 %v1322, %v1359
      %v1392 = vadd.f32 %v1323, %v1360
      %v1393 = vadd.f32 %v1324, %v1361
      %v1394 = vadd.f32 %v1325, %v1362
      %v1395 = vadd.f32 %v1326, %v1363
      %v1396 = vadd.f32 %v1327, %v1364
      %v1397 = vadd.f32 %v1328, %v1365
      %v1398 = vadd.f32 %v1329, %v1366
      %v1399 = vadd.f32 %v1330, %v1367
      %v1400 = vadd.f32 %v1331, %v1368
      %v1401 = vadd.f32 %v1332, %v1369
      %v1402 = vadd.f32 %v1333, %v1370
      %v1403 = vadd.f32 %v1334, %v1371
      %v1404 = vadd.f32 %v1335, %v1372
      %v1405 = vadd.f32 %v1336, %v1373
      %v1406 = vadd.f32 %v1337, %v1374
      %v1407 = vadd.f32 %v1338, %v1375
      %v1408 = vadd.f32 %v1339, %v1376
      %v1409 = vadd.f32 %v1340, %v1377
      %v1410 = vadd.f32 %v1341, %v1378
      %v1411 = vadd.f32 %v1342, %v1379
      %v1412 = vadd.f32 %v1343, %v1380
      %v1413 = vadd.f32 %v1344, %v1381
      %v1414 = vadd.f32 %v1345, %v1382
      %v1415 = vadd.f32 %v1346, %v1383
      %v1416 = vadd.f32 %v1347, %v1384
      %v1417 = vadd.f32 %v1348, %v1385
      %v1418 = vld [vmem:[%s4 + $0x7] sm:$0x1]
      %v1419 = vlaneseq
      %v1420 = vshrl.u32 %v1419, 7
      %v1421 = vsub.s32 0, %v1420
      %v1422 = vrot.slane %v1418, %v1421
      %v1423 = vmul.f32 %v1105, %v1422
      %v1424 = vmul.f32 %v1106, %v1422
      %v1425 = vmul.f32 %v1107, %v1422
      %v1426 = vmul.f32 %v1108, %v1422
      %v1427 = vmul.f32 %v1109, %v1422
      %v1428 = vmul.f32 %v1110, %v1422
      %v1429 = vmul.f32 %v1111, %v1422
      %v1430 = vmul.f32 %v1112, %v1422
      %v1431 = vmul.f32 %v1113, %v1422
      %v1432 = vmul.f32 %v1114, %v1422
      %v1433 = vmul.f32 %v1115, %v1422
      %v1434 = vmul.f32 %v1116, %v1422
      %v1435 = vmul.f32 %v1117, %v1422
      %v1436 = vmul.f32 %v1118, %v1422
      %v1437 = vmul.f32 %v1119, %v1422
      %v1438 = vmul.f32 %v1120, %v1422
      %v1439 = vmul.f32 %v1121, %v1422
      %v1440 = vmul.f32 %v1122, %v1422
      %v1441 = vmul.f32 %v1123, %v1422
      %v1442 = vmul.f32 %v1124, %v1422
      %v1443 = vmul.f32 %v1125, %v1422
      %v1444 = vmul.f32 %v1126, %v1422
      %v1445 = vmul.f32 %v1127, %v1422
      %v1446 = vmul.f32 %v1128, %v1422
      %v1447 = vmul.f32 %v1129, %v1422
      %v1448 = vmul.f32 %v1130, %v1422
      %v1449 = vmul.f32 %v1131, %v1422
      %v1450 = vmul.f32 %v1132, %v1422
      %v1451 = vmul.f32 %v1133, %v1422
      %v1452 = vmul.f32 %v1134, %v1422
      %v1453 = vmul.f32 %v1135, %v1422
      %v1454 = vmul.f32 %v1136, %v1422
      %v1455 = vadd.f32 %v1386, %v1423
      %v1456 = vadd.f32 %v1387, %v1424
      %v1457 = vadd.f32 %v1388, %v1425
      %v1458 = vadd.f32 %v1389, %v1426
      %v1459 = vadd.f32 %v1390, %v1427
      %v1460 = vadd.f32 %v1391, %v1428
      %v1461 = vadd.f32 %v1392, %v1429
      %v1462 = vadd.f32 %v1393, %v1430
      %v1463 = vadd.f32 %v1394, %v1431
      %v1464 = vadd.f32 %v1395, %v1432
      %v1465 = vadd.f32 %v1396, %v1433
      %v1466 = vadd.f32 %v1397, %v1434
      %v1467 = vadd.f32 %v1398, %v1435
      %v1468 = vadd.f32 %v1399, %v1436
      %v1469 = vadd.f32 %v1400, %v1437
      %v1470 = vadd.f32 %v1401, %v1438
      %v1471 = vadd.f32 %v1402, %v1439
      %v1472 = vadd.f32 %v1403, %v1440
      %v1473 = vadd.f32 %v1404, %v1441
      %v1474 = vadd.f32 %v1405, %v1442
      %v1475 = vadd.f32 %v1406, %v1443
      %v1476 = vadd.f32 %v1407, %v1444
      %v1477 = vadd.f32 %v1408, %v1445
      %v1478 = vadd.f32 %v1409, %v1446
      %v1479 = vadd.f32 %v1410, %v1447
      %v1480 = vadd.f32 %v1411, %v1448
      %v1481 = vadd.f32 %v1412, %v1449
      %v1482 = vadd.f32 %v1413, %v1450
      %v1483 = vadd.f32 %v1414, %v1451
      %v1484 = vadd.f32 %v1415, %v1452
      %v1485 = vadd.f32 %v1416, %v1453
      %v1486 = vadd.f32 %v1417, %v1454
      %v1487 = vld [vmem:[%s4 + $0x2] sm:$0x1]
      %v1488 = vlaneseq
      %v1489 = vshrl.u32 %v1488, 7
      %v1490 = vsub.s32 0, %v1489
      %v1491 = vrot.slane %v1487, %v1490
      %v1492 = vmul.f32 %v1073, %v1491
      %v1493 = vmul.f32 %v1074, %v1491
      %v1494 = vmul.f32 %v1075, %v1491
      %v1495 = vmul.f32 %v1076, %v1491
      %v1496 = vmul.f32 %v1077, %v1491
      %v1497 = vmul.f32 %v1078, %v1491
      %v1498 = vmul.f32 %v1079, %v1491
      %v1499 = vmul.f32 %v1080, %v1491
      %v1500 = vmul.f32 %v1081, %v1491
      %v1501 = vmul.f32 %v1082, %v1491
      %v1502 = vmul.f32 %v1083, %v1491
      %v1503 = vmul.f32 %v1084, %v1491
      %v1504 = vmul.f32 %v1085, %v1491
      %v1505 = vmul.f32 %v1086, %v1491
      %v1506 = vmul.f32 %v1087, %v1491
      %v1507 = vmul.f32 %v1088, %v1491
      %v1508 = vmul.f32 %v1089, %v1491
      %v1509 = vmul.f32 %v1090, %v1491
      %v1510 = vmul.f32 %v1091, %v1491
      %v1511 = vmul.f32 %v1092, %v1491
      %v1512 = vmul.f32 %v1093, %v1491
      %v1513 = vmul.f32 %v1094, %v1491
      %v1514 = vmul.f32 %v1095, %v1491
      %v1515 = vmul.f32 %v1096, %v1491
      %v1516 = vmul.f32 %v1097, %v1491
      %v1517 = vmul.f32 %v1098, %v1491
      %v1518 = vmul.f32 %v1099, %v1491
      %v1519 = vmul.f32 %v1100, %v1491
      %v1520 = vmul.f32 %v1101, %v1491
      %v1521 = vmul.f32 %v1102, %v1491
      %v1522 = vmul.f32 %v1103, %v1491
      %v1523 = vmul.f32 %v1104, %v1491
      %v1524 = vld [vmem:[%s4 + $0x5] sm:$0x1]
      %v1525 = vlaneseq
      %v1526 = vshrl.u32 %v1525, 7
      %v1527 = vsub.s32 0, %v1526
      %v1528 = vrot.slane %v1524, %v1527
      %v1529 = vmul.f32 %v701, %v1528
      %v1530 = vmul.f32 %v706, %v1528
      %v1531 = vmul.f32 %v711, %v1528
      %v1532 = vmul.f32 %v716, %v1528
      %v1533 = vmul.f32 %v721, %v1528
      %v1534 = vmul.f32 %v726, %v1528
      %v1535 = vmul.f32 %v731, %v1528
      %v1536 = vmul.f32 %v736, %v1528
      %v1537 = vmul.f32 %v741, %v1528
      %v1538 = vmul.f32 %v746, %v1528
      %v1539 = vmul.f32 %v751, %v1528
      %v1540 = vmul.f32 %v756, %v1528
      %v1541 = vmul.f32 %v761, %v1528
      %v1542 = vmul.f32 %v766, %v1528
      %v1543 = vmul.f32 %v771, %v1528
      %v1544 = vmul.f32 %v776, %v1528
      %v1545 = vmul.f32 %v781, %v1528
      %v1546 = vmul.f32 %v786, %v1528
      %v1547 = vmul.f32 %v791, %v1528
      %v1548 = vmul.f32 %v796, %v1528
      %v1549 = vmul.f32 %v801, %v1528
      %v1550 = vmul.f32 %v806, %v1528
      %v1551 = vmul.f32 %v811, %v1528
      %v1552 = vmul.f32 %v816, %v1528
      %v1553 = vmul.f32 %v821, %v1528
      %v1554 = vmul.f32 %v826, %v1528
      %v1555 = vmul.f32 %v831, %v1528
      %v1556 = vmul.f32 %v836, %v1528
      %v1557 = vmul.f32 %v841, %v1528
      %v1558 = vmul.f32 %v846, %v1528
      %v1559 = vmul.f32 %v851, %v1528
      %v1560 = vmul.f32 %v856, %v1528
      %v1561 = vadd.f32 %v1492, %v1529
      %v1562 = vadd.f32 %v1493, %v1530
      %v1563 = vadd.f32 %v1494, %v1531
      %v1564 = vadd.f32 %v1495, %v1532
      %v1565 = vadd.f32 %v1496, %v1533
      %v1566 = vadd.f32 %v1497, %v1534
      %v1567 = vadd.f32 %v1498, %v1535
      %v1568 = vadd.f32 %v1499, %v1536
      %v1569 = vadd.f32 %v1500, %v1537
      %v1570 = vadd.f32 %v1501, %v1538
      %v1571 = vadd.f32 %v1502, %v1539
      %v1572 = vadd.f32 %v1503, %v1540
      %v1573 = vadd.f32 %v1504, %v1541
      %v1574 = vadd.f32 %v1505, %v1542
      %v1575 = vadd.f32 %v1506, %v1543
      %v1576 = vadd.f32 %v1507, %v1544
      %v1577 = vadd.f32 %v1508, %v1545
      %v1578 = vadd.f32 %v1509, %v1546
      %v1579 = vadd.f32 %v1510, %v1547
      %v1580 = vadd.f32 %v1511, %v1548
      %v1581 = vadd.f32 %v1512, %v1549
      %v1582 = vadd.f32 %v1513, %v1550
      %v1583 = vadd.f32 %v1514, %v1551
      %v1584 = vadd.f32 %v1515, %v1552
      %v1585 = vadd.f32 %v1516, %v1553
      %v1586 = vadd.f32 %v1517, %v1554
      %v1587 = vadd.f32 %v1518, %v1555
      %v1588 = vadd.f32 %v1519, %v1556
      %v1589 = vadd.f32 %v1520, %v1557
      %v1590 = vadd.f32 %v1521, %v1558
      %v1591 = vadd.f32 %v1522, %v1559
      %v1592 = vadd.f32 %v1523, %v1560
      %v1593 = vld [vmem:[%s4 + $0x8] sm:$0x1]
      %v1594 = vlaneseq
      %v1595 = vshrl.u32 %v1594, 7
      %v1596 = vsub.s32 0, %v1595
      %v1597 = vrot.slane %v1593, %v1596
      %v1598 = vmul.f32 %v1105, %v1597
      %v1599 = vmul.f32 %v1106, %v1597
      %v1600 = vmul.f32 %v1107, %v1597
      %v1601 = vmul.f32 %v1108, %v1597
      %v1602 = vmul.f32 %v1109, %v1597
      %v1603 = vmul.f32 %v1110, %v1597
      %v1604 = vmul.f32 %v1111, %v1597
      %v1605 = vmul.f32 %v1112, %v1597
      %v1606 = vmul.f32 %v1113, %v1597
      %v1607 = vmul.f32 %v1114, %v1597
      %v1608 = vmul.f32 %v1115, %v1597
      %v1609 = vmul.f32 %v1116, %v1597
      %v1610 = vmul.f32 %v1117, %v1597
      %v1611 = vmul.f32 %v1118, %v1597
      %v1612 = vmul.f32 %v1119, %v1597
      %v1613 = vmul.f32 %v1120, %v1597
      %v1614 = vmul.f32 %v1121, %v1597
      %v1615 = vmul.f32 %v1122, %v1597
      %v1616 = vmul.f32 %v1123, %v1597
      %v1617 = vmul.f32 %v1124, %v1597
      %v1618 = vmul.f32 %v1125, %v1597
      %v1619 = vmul.f32 %v1126, %v1597
      %v1620 = vmul.f32 %v1127, %v1597
      %v1621 = vmul.f32 %v1128, %v1597
      %v1622 = vmul.f32 %v1129, %v1597
      %v1623 = vmul.f32 %v1130, %v1597
      %v1624 = vmul.f32 %v1131, %v1597
      %v1625 = vmul.f32 %v1132, %v1597
      %v1626 = vmul.f32 %v1133, %v1597
      %v1627 = vmul.f32 %v1134, %v1597
      %v1628 = vmul.f32 %v1135, %v1597
      %v1629 = vmul.f32 %v1136, %v1597
      %v1630 = vadd.f32 %v1561, %v1598
      %v1631 = vadd.f32 %v1562, %v1599
      %v1632 = vadd.f32 %v1563, %v1600
      %v1633 = vadd.f32 %v1564, %v1601
      %v1634 = vadd.f32 %v1565, %v1602
      %v1635 = vadd.f32 %v1566, %v1603
      %v1636 = vadd.f32 %v1567, %v1604
      %v1637 = vadd.f32 %v1568, %v1605
      %v1638 = vadd.f32 %v1569, %v1606
      %v1639 = vadd.f32 %v1570, %v1607
      %v1640 = vadd.f32 %v1571, %v1608
      %v1641 = vadd.f32 %v1572, %v1609
      %v1642 = vadd.f32 %v1573, %v1610
      %v1643 = vadd.f32 %v1574, %v1611
      %v1644 = vadd.f32 %v1575, %v1612
      %v1645 = vadd.f32 %v1576, %v1613
      %v1646 = vadd.f32 %v1577, %v1614
      %v1647 = vadd.f32 %v1578, %v1615
      %v1648 = vadd.f32 %v1579, %v1616
      %v1649 = vadd.f32 %v1580, %v1617
      %v1650 = vadd.f32 %v1581, %v1618
      %v1651 = vadd.f32 %v1582, %v1619
      %v1652 = vadd.f32 %v1583, %v1620
      %v1653 = vadd.f32 %v1584, %v1621
      %v1654 = vadd.f32 %v1585, %v1622
      %v1655 = vadd.f32 %v1586, %v1623
      %v1656 = vadd.f32 %v1587, %v1624
      %v1657 = vadd.f32 %v1588, %v1625
      %v1658 = vadd.f32 %v1589, %v1626
      %v1659 = vadd.f32 %v1590, %v1627
      %v1660 = vadd.f32 %v1591, %v1628
      %v1661 = vadd.f32 %v1592, %v1629
      %v1662 = vld [vmem:[%s7] sm:$0xff]
      %v1663 = vld [vmem:[%s7 + $0x8] sm:$0xff]
      %v1664 = vld [vmem:[%s7 + $0x10] sm:$0xff]
      %v1665 = vld [vmem:[%s7 + $0x18] sm:$0xff]
      %v1666 = vld [vmem:[%s7 + $0x20] sm:$0xff]
      %v1667 = vld [vmem:[%s7 + $0x28] sm:$0xff]
      %v1668 = vld [vmem:[%s7 + $0x30] sm:$0xff]
      %v1669 = vld [vmem:[%s7 + $0x38] sm:$0xff]
      %v1670 = vld [vmem:[%s7 + $0x40] sm:$0xff]
      %v1671 = vld [vmem:[%s7 + $0x48] sm:$0xff]
      %v1672 = vld [vmem:[%s7 + $0x50] sm:$0xff]
      %v1673 = vld [vmem:[%s7 + $0x58] sm:$0xff]
      %v1674 = vld [vmem:[%s7 + $0x60] sm:$0xff]
      %v1675 = vld [vmem:[%s7 + $0x68] sm:$0xff]
      %v1676 = vld [vmem:[%s7 + $0x70] sm:$0xff]
      %v1677 = vld [vmem:[%s7 + $0x78] sm:$0xff]
      %v1678 = vld [vmem:[%s7 + $0x80] sm:$0xff]
      %v1679 = vld [vmem:[%s7 + $0x88] sm:$0xff]
      %v1680 = vld [vmem:[%s7 + $0x90] sm:$0xff]
      %v1681 = vld [vmem:[%s7 + $0x98] sm:$0xff]
      %v1682 = vld [vmem:[%s7 + $0xa0] sm:$0xff]
      %v1683 = vld [vmem:[%s7 + $0xa8] sm:$0xff]
      %v1684 = vld [vmem:[%s7 + $0xb0] sm:$0xff]
      %v1685 = vld [vmem:[%s7 + $0xb8] sm:$0xff]
      %v1686 = vld [vmem:[%s7 + $0xc0] sm:$0xff]
      %v1687 = vld [vmem:[%s7 + $0xc8] sm:$0xff]
      %v1688 = vld [vmem:[%s7 + $0xd0] sm:$0xff]
      %v1689 = vld [vmem:[%s7 + $0xd8] sm:$0xff]
      %v1690 = vld [vmem:[%s7 + $0xe0] sm:$0xff]
      %v1691 = vld [vmem:[%s7 + $0xe8] sm:$0xff]
      %v1692 = vld [vmem:[%s7 + $0xf0] sm:$0xff]
      %v1693 = vld [vmem:[%s7 + $0xf8] sm:$0xff]
      %v1694 = vrot.slane %v1280, 7
      %v1695 = vrot.slane %v1281, 7
      %v1696 = vrot.slane %v1282, 7
      %v1697 = vrot.slane %v1283, 7
      %v1698 = vrot.slane %v1284, 7
      %v1699 = vrot.slane %v1285, 7
      %v1700 = vrot.slane %v1286, 7
      %v1701 = vrot.slane %v1287, 7
      %v1702 = vrot.slane %v1288, 7
      %v1703 = vrot.slane %v1289, 7
      %v1704 = vrot.slane %v1290, 7
      %v1705 = vrot.slane %v1291, 7
      %v1706 = vrot.slane %v1292, 7
      %v1707 = vrot.slane %v1293, 7
      %v1708 = vrot.slane %v1294, 7
      %v1709 = vrot.slane %v1295, 7
      %v1710 = vrot.slane %v1296, 7
      %v1711 = vrot.slane %v1297, 7
      %v1712 = vrot.slane %v1298, 7
      %v1713 = vrot.slane %v1299, 7
      %v1714 = vrot.slane %v1300, 7
      %v1715 = vrot.slane %v1301, 7
      %v1716 = vrot.slane %v1302, 7
      %v1717 = vrot.slane %v1303, 7
      %v1718 = vrot.slane %v1304, 7
      %v1719 = vrot.slane %v1305, 7
      %v1720 = vrot.slane %v1306, 7
      %v1721 = vrot.slane %v1307, 7
      %v1722 = vrot.slane %v1308, 7
      %v1723 = vrot.slane %v1309, 7
      %v1724 = vrot.slane %v1310, 7
      %v1725 = vrot.slane %v1311, 7
      %v1726 = vlaneseq
      %v1727 = vshrl.u32 %v1726, 7
      %vm1728 = vcmp.lt.s32.totalorder %v1727, 1
      %v1729 = vsel %vm1728, %v1724, %v1725
      %v1730 = vsel %vm1728, %v1723, %v1724
      %v1731 = vsel %vm1728, %v1722, %v1723
      %v1732 = vsel %vm1728, %v1721, %v1722
      %v1733 = vsel %vm1728, %v1720, %v1721
      %v1734 = vsel %vm1728, %v1719, %v1720
      %v1735 = vsel %vm1728, %v1718, %v1719
      %v1736 = vsel %vm1728, %v1717, %v1718
      %v1737 = vsel %vm1728, %v1716, %v1717
      %v1738 = vsel %vm1728, %v1715, %v1716
      %v1739 = vsel %vm1728, %v1714, %v1715
      %v1740 = vsel %vm1728, %v1713, %v1714
      %v1741 = vsel %vm1728, %v1712, %v1713
      %v1742 = vsel %vm1728, %v1711, %v1712
      %v1743 = vsel %vm1728, %v1710, %v1711
      %v1744 = vsel %vm1728, %v1709, %v1710
      %v1745 = vsel %vm1728, %v1708, %v1709
      %v1746 = vsel %vm1728, %v1707, %v1708
      %v1747 = vsel %vm1728, %v1706, %v1707
      %v1748 = vsel %vm1728, %v1705, %v1706
      %v1749 = vsel %vm1728, %v1704, %v1705
      %v1750 = vsel %vm1728, %v1703, %v1704
      %v1751 = vsel %vm1728, %v1702, %v1703
      %v1752 = vsel %vm1728, %v1701, %v1702
      %v1753 = vsel %vm1728, %v1700, %v1701
      %v1754 = vsel %vm1728, %v1699, %v1700
      %v1755 = vsel %vm1728, %v1698, %v1699
      %v1756 = vsel %vm1728, %v1697, %v1698
      %v1757 = vsel %vm1728, %v1696, %v1697
      %v1758 = vsel %vm1728, %v1695, %v1696
      %v1759 = vsel %vm1728, %v1694, %v1695
      %v1760 = vsel %vm1728, %v1725, %v1694
      %1762 = vset.pattern.permute.xlu0 0
      %1763 = vperm.xlu0 %1762, %v1662
      %v1764 = vpop.permute.xlu0 %1763
      %1767 = vset.pattern.permute.xlu0 0
      %1768 = vperm.xlu0 %1767, %v1663
      %v1769 = vpop.permute.xlu0 %1768
      %1772 = vset.pattern.permute.xlu0 0
      %1773 = vperm.xlu0 %1772, %v1664
      %v1774 = vpop.permute.xlu0 %1773
      %1777 = vset.pattern.permute.xlu0 0
      %1778 = vperm.xlu0 %1777, %v1665
      %v1779 = vpop.permute.xlu0 %1778
      %1782 = vset.pattern.permute.xlu0 0
      %1783 = vperm.xlu0 %1782, %v1666
      %v1784 = vpop.permute.xlu0 %1783
      %1787 = vset.pattern.permute.xlu0 0
      %1788 = vperm.xlu0 %1787, %v1667
      %v1789 = vpop.permute.xlu0 %1788
      %1792 = vset.pattern.permute.xlu0 0
      %1793 = vperm.xlu0 %1792, %v1668
      %v1794 = vpop.permute.xlu0 %1793
      %1797 = vset.pattern.permute.xlu0 0
      %1798 = vperm.xlu0 %1797, %v1669
      %v1799 = vpop.permute.xlu0 %1798
      %1802 = vset.pattern.permute.xlu0 0
      %1803 = vperm.xlu0 %1802, %v1670
      %v1804 = vpop.permute.xlu0 %1803
      %1807 = vset.pattern.permute.xlu0 0
      %1808 = vperm.xlu0 %1807, %v1671
      %v1809 = vpop.permute.xlu0 %1808
      %1812 = vset.pattern.permute.xlu0 0
      %1813 = vperm.xlu0 %1812, %v1672
      %v1814 = vpop.permute.xlu0 %1813
      %1817 = vset.pattern.permute.xlu0 0
      %1818 = vperm.xlu0 %1817, %v1673
      %v1819 = vpop.permute.xlu0 %1818
      %1822 = vset.pattern.permute.xlu0 0
      %1823 = vperm.xlu0 %1822, %v1674
      %v1824 = vpop.permute.xlu0 %1823
      %1827 = vset.pattern.permute.xlu0 0
      %1828 = vperm.xlu0 %1827, %v1675
      %v1829 = vpop.permute.xlu0 %1828
      %1832 = vset.pattern.permute.xlu0 0
      %1833 = vperm.xlu0 %1832, %v1676
      %v1834 = vpop.permute.xlu0 %1833
      %1837 = vset.pattern.permute.xlu0 0
      %1838 = vperm.xlu0 %1837, %v1677
      %v1839 = vpop.permute.xlu0 %1838
      %1842 = vset.pattern.permute.xlu0 0
      %1843 = vperm.xlu0 %1842, %v1678
      %v1844 = vpop.permute.xlu0 %1843
      %1847 = vset.pattern.permute.xlu0 0
      %1848 = vperm.xlu0 %1847, %v1679
      %v1849 = vpop.permute.xlu0 %1848
      %1852 = vset.pattern.permute.xlu0 0
      %1853 = vperm.xlu0 %1852, %v1680
      %v1854 = vpop.permute.xlu0 %1853
      %1857 = vset.pattern.permute.xlu0 0
      %1858 = vperm.xlu0 %1857, %v1681
      %v1859 = vpop.permute.xlu0 %1858
      %1862 = vset.pattern.permute.xlu0 0
      %1863 = vperm.xlu0 %1862, %v1682
      %v1864 = vpop.permute.xlu0 %1863
      %1867 = vset.pattern.permute.xlu0 0
      %1868 = vperm.xlu0 %1867, %v1683
      %v1869 = vpop.permute.xlu0 %1868
      %1872 = vset.pattern.permute.xlu0 0
      %1873 = vperm.xlu0 %1872, %v1684
      %v1874 = vpop.permute.xlu0 %1873
      %1877 = vset.pattern.permute.xlu0 0
      %1878 = vperm.xlu0 %1877, %v1685
      %v1879 = vpop.permute.xlu0 %1878
      %1882 = vset.pattern.permute.xlu0 0
      %1883 = vperm.xlu0 %1882, %v1686
      %v1884 = vpop.permute.xlu0 %1883
      %1887 = vset.pattern.permute.xlu0 0
      %1888 = vperm.xlu0 %1887, %v1687
      %v1889 = vpop.permute.xlu0 %1888
      %1892 = vset.pattern.permute.xlu0 0
      %1893 = vperm.xlu0 %1892, %v1688
      %v1894 = vpop.permute.xlu0 %1893
      %1897 = vset.pattern.permute.xlu0 0
      %1898 = vperm.xlu0 %1897, %v1689
      %v1899 = vpop.permute.xlu0 %1898
      %1902 = vset.pattern.permute.xlu0 0
      %1903 = vperm.xlu0 %1902, %v1690
      %v1904 = vpop.permute.xlu0 %1903
      %1907 = vset.pattern.permute.xlu0 0
      %1908 = vperm.xlu0 %1907, %v1691
      %v1909 = vpop.permute.xlu0 %1908
      %1912 = vset.pattern.permute.xlu0 0
      %1913 = vperm.xlu0 %1912, %v1692
      %v1914 = vpop.permute.xlu0 %1913
      %1917 = vset.pattern.permute.xlu0 0
      %1918 = vperm.xlu0 %1917, %v1693
      %v1919 = vpop.permute.xlu0 %1918
      %v1921 = vmul.f32 %v1764, %v1760
      %v1922 = vmul.f32 %v1769, %v1759
      %v1923 = vmul.f32 %v1774, %v1758
      %v1924 = vmul.f32 %v1779, %v1757
      %v1925 = vmul.f32 %v1784, %v1756
      %v1926 = vmul.f32 %v1789, %v1755
      %v1927 = vmul.f32 %v1794, %v1754
      %v1928 = vmul.f32 %v1799, %v1753
      %v1929 = vmul.f32 %v1804, %v1752
      %v1930 = vmul.f32 %v1809, %v1751
      %v1931 = vmul.f32 %v1814, %v1750
      %v1932 = vmul.f32 %v1819, %v1749
      %v1933 = vmul.f32 %v1824, %v1748
      %v1934 = vmul.f32 %v1829, %v1747
      %v1935 = vmul.f32 %v1834, %v1746
      %v1936 = vmul.f32 %v1839, %v1745
      %v1937 = vmul.f32 %v1844, %v1744
      %v1938 = vmul.f32 %v1849, %v1743
      %v1939 = vmul.f32 %v1854, %v1742
      %v1940 = vmul.f32 %v1859, %v1741
      %v1941 = vmul.f32 %v1864, %v1740
      %v1942 = vmul.f32 %v1869, %v1739
      %v1943 = vmul.f32 %v1874, %v1738
      %v1944 = vmul.f32 %v1879, %v1737
      %v1945 = vmul.f32 %v1884, %v1736
      %v1946 = vmul.f32 %v1889, %v1735
      %v1947 = vmul.f32 %v1894, %v1734
      %v1948 = vmul.f32 %v1899, %v1733
      %v1949 = vmul.f32 %v1904, %v1732
      %v1950 = vmul.f32 %v1909, %v1731
      %v1951 = vmul.f32 %v1914, %v1730
      %v1952 = vmul.f32 %v1919, %v1729
      %v1953 = vadd.f32 %v1921, %v1455
      %v1954 = vadd.f32 %v1922, %v1456
      %v1955 = vadd.f32 %v1923, %v1457
      %v1956 = vadd.f32 %v1924, %v1458
      %v1957 = vadd.f32 %v1925, %v1459
      %v1958 = vadd.f32 %v1926, %v1460
      %v1959 = vadd.f32 %v1927, %v1461
      %v1960 = vadd.f32 %v1928, %v1462
      %v1961 = vadd.f32 %v1929, %v1463
      %v1962 = vadd.f32 %v1930, %v1464
      %v1963 = vadd.f32 %v1931, %v1465
      %v1964 = vadd.f32 %v1932, %v1466
      %v1965 = vadd.f32 %v1933, %v1467
      %v1966 = vadd.f32 %v1934, %v1468
      %v1967 = vadd.f32 %v1935, %v1469
      %v1968 = vadd.f32 %v1936, %v1470
      %v1969 = vadd.f32 %v1937, %v1471
      %v1970 = vadd.f32 %v1938, %v1472
      %v1971 = vadd.f32 %v1939, %v1473
      %v1972 = vadd.f32 %v1940, %v1474
      %v1973 = vadd.f32 %v1941, %v1475
      %v1974 = vadd.f32 %v1942, %v1476
      %v1975 = vadd.f32 %v1943, %v1477
      %v1976 = vadd.f32 %v1944, %v1478
      %v1977 = vadd.f32 %v1945, %v1479
      %v1978 = vadd.f32 %v1946, %v1480
      %v1979 = vadd.f32 %v1947, %v1481
      %v1980 = vadd.f32 %v1948, %v1482
      %v1981 = vadd.f32 %v1949, %v1483
      %v1982 = vadd.f32 %v1950, %v1484
      %v1983 = vadd.f32 %v1951, %v1485
      %v1984 = vadd.f32 %v1952, %v1486
      %v1985 = vld [vmem:[%s8] sm:$0xff]
      %v1986 = vld [vmem:[%s8 + $0x8] sm:$0xff]
      %v1987 = vld [vmem:[%s8 + $0x10] sm:$0xff]
      %v1988 = vld [vmem:[%s8 + $0x18] sm:$0xff]
      %v1989 = vld [vmem:[%s8 + $0x20] sm:$0xff]
      %v1990 = vld [vmem:[%s8 + $0x28] sm:$0xff]
      %v1991 = vld [vmem:[%s8 + $0x30] sm:$0xff]
      %v1992 = vld [vmem:[%s8 + $0x38] sm:$0xff]
      %v1993 = vld [vmem:[%s8 + $0x40] sm:$0xff]
      %v1994 = vld [vmem:[%s8 + $0x48] sm:$0xff]
      %v1995 = vld [vmem:[%s8 + $0x50] sm:$0xff]
      %v1996 = vld [vmem:[%s8 + $0x58] sm:$0xff]
      %v1997 = vld [vmem:[%s8 + $0x60] sm:$0xff]
      %v1998 = vld [vmem:[%s8 + $0x68] sm:$0xff]
      %v1999 = vld [vmem:[%s8 + $0x70] sm:$0xff]
      %v2000 = vld [vmem:[%s8 + $0x78] sm:$0xff]
      %v2001 = vld [vmem:[%s8 + $0x80] sm:$0xff]
      %v2002 = vld [vmem:[%s8 + $0x88] sm:$0xff]
      %v2003 = vld [vmem:[%s8 + $0x90] sm:$0xff]
      %v2004 = vld [vmem:[%s8 + $0x98] sm:$0xff]
      %v2005 = vld [vmem:[%s8 + $0xa0] sm:$0xff]
      %v2006 = vld [vmem:[%s8 + $0xa8] sm:$0xff]
      %v2007 = vld [vmem:[%s8 + $0xb0] sm:$0xff]
      %v2008 = vld [vmem:[%s8 + $0xb8] sm:$0xff]
      %v2009 = vld [vmem:[%s8 + $0xc0] sm:$0xff]
      %v2010 = vld [vmem:[%s8 + $0xc8] sm:$0xff]
      %v2011 = vld [vmem:[%s8 + $0xd0] sm:$0xff]
      %v2012 = vld [vmem:[%s8 + $0xd8] sm:$0xff]
      %v2013 = vld [vmem:[%s8 + $0xe0] sm:$0xff]
      %v2014 = vld [vmem:[%s8 + $0xe8] sm:$0xff]
      %v2015 = vld [vmem:[%s8 + $0xf0] sm:$0xff]
      %v2016 = vld [vmem:[%s8 + $0xf8] sm:$0xff]
      %v2017 = vrot.slane %v1630, 1
      %v2018 = vrot.slane %v1631, 1
      %v2019 = vrot.slane %v1632, 1
      %v2020 = vrot.slane %v1633, 1
      %v2021 = vrot.slane %v1634, 1
      %v2022 = vrot.slane %v1635, 1
      %v2023 = vrot.slane %v1636, 1
      %v2024 = vrot.slane %v1637, 1
      %v2025 = vrot.slane %v1638, 1
      %v2026 = vrot.slane %v1639, 1
      %v2027 = vrot.slane %v1640, 1
      %v2028 = vrot.slane %v1641, 1
      %v2029 = vrot.slane %v1642, 1
      %v2030 = vrot.slane %v1643, 1
      %v2031 = vrot.slane %v1644, 1
      %v2032 = vrot.slane %v1645, 1
      %v2033 = vrot.slane %v1646, 1
      %v2034 = vrot.slane %v1647, 1
      %v2035 = vrot.slane %v1648, 1
      %v2036 = vrot.slane %v1649, 1
      %v2037 = vrot.slane %v1650, 1
      %v2038 = vrot.slane %v1651, 1
      %v2039 = vrot.slane %v1652, 1
      %v2040 = vrot.slane %v1653, 1
      %v2041 = vrot.slane %v1654, 1
      %v2042 = vrot.slane %v1655, 1
      %v2043 = vrot.slane %v1656, 1
      %v2044 = vrot.slane %v1657, 1
      %v2045 = vrot.slane %v1658, 1
      %v2046 = vrot.slane %v1659, 1
      %v2047 = vrot.slane %v1660, 1
      %v2048 = vrot.slane %v1661, 1
      %vm2049 = vcmp.lt.s32.totalorder %v1727, 7
      %v2050 = vsel %vm2049, %v2047, %v2048
      %v2051 = vsel %vm2049, %v2046, %v2047
      %v2052 = vsel %vm2049, %v2045, %v2046
      %v2053 = vsel %vm2049, %v2044, %v2045
      %v2054 = vsel %vm2049, %v2043, %v2044
      %v2055 = vsel %vm2049, %v2042, %v2043
      %v2056 = vsel %vm2049, %v2041, %v2042
      %v2057 = vsel %vm2049, %v2040, %v2041
      %v2058 = vsel %vm2049, %v2039, %v2040
      %v2059 = vsel %vm2049, %v2038, %v2039
      %v2060 = vsel %vm2049, %v2037, %v2038
      %v2061 = vsel %vm2049, %v2036, %v2037
      %v2062 = vsel %vm2049, %v2035, %v2036
      %v2063 = vsel %vm2049, %v2034, %v2035
      %v2064 = vsel %vm2049, %v2033, %v2034
      %v2065 = vsel %vm2049, %v2032, %v2033
      %v2066 = vsel %vm2049, %v2031, %v2032
      %v2067 = vsel %vm2049, %v2030, %v2031
      %v2068 = vsel %vm2049, %v2029, %v2030
      %v2069 = vsel %vm2049, %v2028, %v2029
      %v2070 = vsel %vm2049, %v2027, %v2028
      %v2071 = vsel %vm2049, %v2026, %v2027
      %v2072 = vsel %vm2049, %v2025, %v2026
      %v2073 = vsel %vm2049, %v2024, %v2025
      %v2074 = vsel %vm2049, %v2023, %v2024
      %v2075 = vsel %vm2049, %v2022, %v2023
      %v2076 = vsel %vm2049, %v2021, %v2022
      %v2077 = vsel %vm2049, %v2020, %v2021
      %v2078 = vsel %vm2049, %v2019, %v2020
      %v2079 = vsel %vm2049, %v2018, %v2019
      %v2080 = vsel %vm2049, %v2017, %v2018
      %v2081 = vsel %vm2049, %v2048, %v2017
      %2083 = vset.pattern.permute.xlu0 0
      %2084 = vperm.xlu0 %2083, %v1985
      %v2085 = vpop.permute.xlu0 %2084
      %2088 = vset.pattern.permute.xlu0 0
      %2089 = vperm.xlu0 %2088, %v1986
      %v2090 = vpop.permute.xlu0 %2089
      %2093 = vset.pattern.permute.xlu0 0
      %2094 = vperm.xlu0 %2093, %v1987
      %v2095 = vpop.permute.xlu0 %2094
      %2098 = vset.pattern.permute.xlu0 0
      %2099 = vperm.xlu0 %2098, %v1988
      %v2100 = vpop.permute.xlu0 %2099
      %2103 = vset.pattern.permute.xlu0 0
      %2104 = vperm.xlu0 %2103, %v1989
      %v2105 = vpop.permute.xlu0 %2104
      %2108 = vset.pattern.permute.xlu0 0
      %2109 = vperm.xlu0 %2108, %v1990
      %v2110 = vpop.permute.xlu0 %2109
      %2113 = vset.pattern.permute.xlu0 0
      %2114 = vperm.xlu0 %2113, %v1991
      %v2115 = vpop.permute.xlu0 %2114
      %2118 = vset.pattern.permute.xlu0 0
      %2119 = vperm.xlu0 %2118, %v1992
      %v2120 = vpop.permute.xlu0 %2119
      %2123 = vset.pattern.permute.xlu0 0
      %2124 = vperm.xlu0 %2123, %v1993
      %v2125 = vpop.permute.xlu0 %2124
      %2128 = vset.pattern.permute.xlu0 0
      %2129 = vperm.xlu0 %2128, %v1994
      %v2130 = vpop.permute.xlu0 %2129
      %2133 = vset.pattern.permute.xlu0 0
      %2134 = vperm.xlu0 %2133, %v1995
      %v2135 = vpop.permute.xlu0 %2134
      %2138 = vset.pattern.permute.xlu0 0
      %2139 = vperm.xlu0 %2138, %v1996
      %v2140 = vpop.permute.xlu0 %2139
      %2143 = vset.pattern.permute.xlu0 0
      %2144 = vperm.xlu0 %2143, %v1997
      %v2145 = vpop.permute.xlu0 %2144
      %2148 = vset.pattern.permute.xlu0 0
      %2149 = vperm.xlu0 %2148, %v1998
      %v2150 = vpop.permute.xlu0 %2149
      %2153 = vset.pattern.permute.xlu0 0
      %2154 = vperm.xlu0 %2153, %v1999
      %v2155 = vpop.permute.xlu0 %2154
      %2158 = vset.pattern.permute.xlu0 0
      %2159 = vperm.xlu0 %2158, %v2000
      %v2160 = vpop.permute.xlu0 %2159
      %2163 = vset.pattern.permute.xlu0 0
      %2164 = vperm.xlu0 %2163, %v2001
      %v2165 = vpop.permute.xlu0 %2164
      %2168 = vset.pattern.permute.xlu0 0
      %2169 = vperm.xlu0 %2168, %v2002
      %v2170 = vpop.permute.xlu0 %2169
      %2173 = vset.pattern.permute.xlu0 0
      %2174 = vperm.xlu0 %2173, %v2003
      %v2175 = vpop.permute.xlu0 %2174
      %2178 = vset.pattern.permute.xlu0 0
      %2179 = vperm.xlu0 %2178, %v2004
      %v2180 = vpop.permute.xlu0 %2179
      %2183 = vset.pattern.permute.xlu0 0
      %2184 = vperm.xlu0 %2183, %v2005
      %v2185 = vpop.permute.xlu0 %2184
      %2188 = vset.pattern.permute.xlu0 0
      %2189 = vperm.xlu0 %2188, %v2006
      %v2190 = vpop.permute.xlu0 %2189
      %2193 = vset.pattern.permute.xlu0 0
      %2194 = vperm.xlu0 %2193, %v2007
      %v2195 = vpop.permute.xlu0 %2194
      %2198 = vset.pattern.permute.xlu0 0
      %2199 = vperm.xlu0 %2198, %v2008
      %v2200 = vpop.permute.xlu0 %2199
      %2203 = vset.pattern.permute.xlu0 0
      %2204 = vperm.xlu0 %2203, %v2009
      %v2205 = vpop.permute.xlu0 %2204
      %2208 = vset.pattern.permute.xlu0 0
      %2209 = vperm.xlu0 %2208, %v2010
      %v2210 = vpop.permute.xlu0 %2209
      %2213 = vset.pattern.permute.xlu0 0
      %2214 = vperm.xlu0 %2213, %v2011
      %v2215 = vpop.permute.xlu0 %2214
      %2218 = vset.pattern.permute.xlu0 0
      %2219 = vperm.xlu0 %2218, %v2012
      %v2220 = vpop.permute.xlu0 %2219
      %2223 = vset.pattern.permute.xlu0 0
      %2224 = vperm.xlu0 %2223, %v2013
      %v2225 = vpop.permute.xlu0 %2224
      %2228 = vset.pattern.permute.xlu0 0
      %2229 = vperm.xlu0 %2228, %v2014
      %v2230 = vpop.permute.xlu0 %2229
      %2233 = vset.pattern.permute.xlu0 0
      %2234 = vperm.xlu0 %2233, %v2015
      %v2235 = vpop.permute.xlu0 %2234
      %2238 = vset.pattern.permute.xlu0 0
      %2239 = vperm.xlu0 %2238, %v2016
      %v2240 = vpop.permute.xlu0 %2239
      %v2242 = vmul.f32 %v2085, %v2080
      %v2243 = vmul.f32 %v2090, %v2079
      %v2244 = vmul.f32 %v2095, %v2078
      %v2245 = vmul.f32 %v2100, %v2077
      %v2246 = vmul.f32 %v2105, %v2076
      %v2247 = vmul.f32 %v2110, %v2075
      %v2248 = vmul.f32 %v2115, %v2074
      %v2249 = vmul.f32 %v2120, %v2073
      %v2250 = vmul.f32 %v2125, %v2072
      %v2251 = vmul.f32 %v2130, %v2071
      %v2252 = vmul.f32 %v2135, %v2070
      %v2253 = vmul.f32 %v2140, %v2069
      %v2254 = vmul.f32 %v2145, %v2068
      %v2255 = vmul.f32 %v2150, %v2067
      %v2256 = vmul.f32 %v2155, %v2066
      %v2257 = vmul.f32 %v2160, %v2065
      %v2258 = vmul.f32 %v2165, %v2064
      %v2259 = vmul.f32 %v2170, %v2063
      %v2260 = vmul.f32 %v2175, %v2062
      %v2261 = vmul.f32 %v2180, %v2061
      %v2262 = vmul.f32 %v2185, %v2060
      %v2263 = vmul.f32 %v2190, %v2059
      %v2264 = vmul.f32 %v2195, %v2058
      %v2265 = vmul.f32 %v2200, %v2057
      %v2266 = vmul.f32 %v2205, %v2056
      %v2267 = vmul.f32 %v2210, %v2055
      %v2268 = vmul.f32 %v2215, %v2054
      %v2269 = vmul.f32 %v2220, %v2053
      %v2270 = vmul.f32 %v2225, %v2052
      %v2271 = vmul.f32 %v2230, %v2051
      %v2272 = vmul.f32 %v2235, %v2050
      %v2273 = vmul.f32 %v2240, %v2081
      %v2274 = vadd.f32 %v1953, %v2242
      %v2275 = vadd.f32 %v1954, %v2243
      %v2276 = vadd.f32 %v1955, %v2244
      %v2277 = vadd.f32 %v1956, %v2245
      %v2278 = vadd.f32 %v1957, %v2246
      %v2279 = vadd.f32 %v1958, %v2247
      %v2280 = vadd.f32 %v1959, %v2248
      %v2281 = vadd.f32 %v1960, %v2249
      %v2282 = vadd.f32 %v1961, %v2250
      %v2283 = vadd.f32 %v1962, %v2251
      %v2284 = vadd.f32 %v1963, %v2252
      %v2285 = vadd.f32 %v1964, %v2253
      %v2286 = vadd.f32 %v1965, %v2254
      %v2287 = vadd.f32 %v1966, %v2255
      %v2288 = vadd.f32 %v1967, %v2256
      %v2289 = vadd.f32 %v1968, %v2257
      %v2290 = vadd.f32 %v1969, %v2258
      %v2291 = vadd.f32 %v1970, %v2259
      %v2292 = vadd.f32 %v1971, %v2260
      %v2293 = vadd.f32 %v1972, %v2261
      %v2294 = vadd.f32 %v1973, %v2262
      %v2295 = vadd.f32 %v1974, %v2263
      %v2296 = vadd.f32 %v1975, %v2264
      %v2297 = vadd.f32 %v1976, %v2265
      %v2298 = vadd.f32 %v1977, %v2266
      %v2299 = vadd.f32 %v1978, %v2267
      %v2300 = vadd.f32 %v1979, %v2268
      %v2301 = vadd.f32 %v1980, %v2269
      %v2302 = vadd.f32 %v1981, %v2270
      %v2303 = vadd.f32 %v1982, %v2271
      %v2304 = vadd.f32 %v1983, %v2272
      %v2305 = vadd.f32 %v1984, %v2273
      %v2306 = vld [vmem:[%s5] sm:$0xff]
      %v2307 = vld [vmem:[%s5 + $0x8] sm:$0xff]
      %v2308 = vld [vmem:[%s5 + $0x10] sm:$0xff]
      %v2309 = vld [vmem:[%s5 + $0x18] sm:$0xff]
      %v2310 = vld [vmem:[%s5 + $0x20] sm:$0xff]
      %v2311 = vld [vmem:[%s5 + $0x28] sm:$0xff]
      %v2312 = vld [vmem:[%s5 + $0x30] sm:$0xff]
      %v2313 = vld [vmem:[%s5 + $0x38] sm:$0xff]
      %v2314 = vld [vmem:[%s5 + $0x40] sm:$0xff]
      %v2315 = vld [vmem:[%s5 + $0x48] sm:$0xff]
      %v2316 = vld [vmem:[%s5 + $0x50] sm:$0xff]
      %v2317 = vld [vmem:[%s5 + $0x58] sm:$0xff]
      %v2318 = vld [vmem:[%s5 + $0x60] sm:$0xff]
      %v2319 = vld [vmem:[%s5 + $0x68] sm:$0xff]
      %v2320 = vld [vmem:[%s5 + $0x70] sm:$0xff]
      %v2321 = vld [vmem:[%s5 + $0x78] sm:$0xff]
      %v2322 = vld [vmem:[%s6] sm:$0x1]
      %v2324 = vlaneseq
      %v2325 = vshrl.u32 %v2324, 7
      %v2326 = vsub.s32 0, %v2325
      %v2327 = vrot.slane %v2322, %v2326
      %2329 = vmatprep.subr.mxu0 0.0
      %2330 = vmatpush1.msra.mxu0 %v2306
      %2331 = vmatprep.subr.mxu0 0.0
      %2332 = vmatpush1.msra.mxu0 %v2307
      %2333 = vmatprep.subr.mxu0 0.0
      %2334 = vmatpush1.msra.mxu0 %v2308
      %2335 = vmatprep.subr.mxu0 0.0
      %2336 = vmatpush1.msra.mxu0 %v2309
      %2337 = vmatprep.subr.mxu0 0.0
      %2338 = vmatpush1.msra.mxu0 %v2310
      %2339 = vmatprep.subr.mxu0 0.0
      %2340 = vmatpush1.msra.mxu0 %v2311
      %2341 = vmatprep.subr.mxu0 0.0
      %2342 = vmatpush1.msra.mxu0 %v2312
      %2343 = vmatprep.subr.mxu0 0.0
      %2344 = vmatpush1.msra.mxu0 %v2313
      %2345 = vmatprep.subr.mxu0 0.0
      %2346 = vmatpush1.msra.mxu0 %v2314
      %2347 = vmatprep.subr.mxu0 0.0
      %2348 = vmatpush1.msra.mxu0 %v2315
      %2349 = vmatprep.subr.mxu0 0.0
      %2350 = vmatpush1.msra.mxu0 %v2316
      %2351 = vmatprep.subr.mxu0 0.0
      %2352 = vmatpush1.msra.mxu0 %v2317
      %2353 = vmatprep.subr.mxu0 0.0
      %2354 = vmatpush1.msra.mxu0 %v2318
      %2355 = vmatprep.subr.mxu0 0.0
      %2356 = vmatpush1.msra.mxu0 %v2319
      %2357 = vmatprep.subr.mxu0 0.0
      %2358 = vmatpush1.msra.mxu0 %v2320
      %2359 = vmatprep.subr.mxu0 0.0
      %2360 = vmatpush1.msra.mxu0 %v2321
      %2361 = vmatprep.subr.mxu0 0.0
      %2362 = vmatpush1.msra.mxu0 0.0
      %2363 = vmatprep.subr.mxu0 0.0
      %2364 = vmatpush1.msra.mxu0 0.0
      %2365 = vmatprep.subr.mxu0 0.0
      %2366 = vmatpush1.msra.mxu0 0.0
      %2367 = vmatprep.subr.mxu0 0.0
      %2368 = vmatpush1.msra.mxu0 0.0
      %2369 = vmatprep.subr.mxu0 0.0
      %2370 = vmatpush1.msra.mxu0 0.0
      %2371 = vmatprep.subr.mxu0 0.0
      %2372 = vmatpush1.msra.mxu0 0.0
      %2373 = vmatprep.subr.mxu0 0.0
      %2374 = vmatpush1.msra.mxu0 0.0
      %2375 = vmatprep.subr.mxu0 0.0
      %2376 = vmatpush1.msra.mxu0 0.0
      %2377 = vmatprep.subr.mxu0 0.0
      %2378 = vmatpush1.msra.mxu0 0.0
      %2379 = vmatprep.subr.mxu0 0.0
      %2380 = vmatpush1.msra.mxu0 0.0
      %2381 = vmatprep.subr.mxu0 0.0
      %2382 = vmatpush1.msra.mxu0 0.0
      %2383 = vmatprep.subr.mxu0 0.0
      %2384 = vmatpush1.msra.mxu0 0.0
      %2385 = vmatprep.subr.mxu0 0.0
      %2386 = vmatpush1.msra.mxu0 0.0
      %2387 = vmatprep.subr.mxu0 0.0
      %2388 = vmatpush1.msra.mxu0 0.0
      %2389 = vmatprep.subr.mxu0 0.0
      %2390 = vmatpush1.msra.mxu0 0.0
      %2391 = vmatprep.subr.mxu0 0.0
      %2392 = vmatpush1.msra.mxu0 0.0
      %2393 = vmatprep.mubr.f32.mxu0 0.0
      %2394 = vmatmul.mubr.f32.gmra.mrb[0].mxu0 %v2274
      %v2395 = vpop.f32.mrb[0].mxu0
      %v2396 = vadd.f32 %v2327, %v2395
      %v2397 = vpop.f32.mrb[0].mxu0
      %2398 = vmatprep.mubr.f32.mxu0 0.0
      %2399 = vmatmul.mubr.f32.gmra.mrb[0].mxu0 %v2275
      %v2400 = vpop.f32.mrb[0].mxu0
      %v2401 = vadd.f32 %v2327, %v2400
      %v2402 = vpop.f32.mrb[0].mxu0
      %2403 = vmatprep.mubr.f32.mxu0 0.0
      %2404 = vmatmul.mubr.f32.gmra.mrb[0].mxu0 %v2276
      %v2405 = vpop.f32.mrb[0].mxu0
      %v2406 = vadd.f32 %v2327, %v2405
      %v2407 = vpop.f32.mrb[0].mxu0
      %2408 = vmatprep.mubr.f32.mxu0 0.0
      %2409 = vmatmul.mubr.f32.gmra.mrb[0].mxu0 %v2277
      %v2410 = vpop.f32.mrb[0].mxu0
      %v2411 = vadd.f32 %v2327, %v2410
      %v2412 = vpop.f32.mrb[0].mxu0
      %2413 = vmatprep.mubr.f32.mxu0 0.0
      %2414 = vmatmul.mubr.f32.gmra.mrb[0].mxu0 %v2278
      %v2415 = vpop.f32.mrb[0].mxu0
      %v2416 = vadd.f32 %v2327, %v2415
      %v2417 = vpop.f32.mrb[0].mxu0
      %2418 = vmatprep.mubr.f32.mxu0 0.0
      %2419 = vmatmul.mubr.f32.gmra.mrb[0].mxu0 %v2279
      %v2420 = vpop.f32.mrb[0].mxu0
      %v2421 = vadd.f32 %v2327, %v2420
      %v2422 = vpop.f32.mrb[0].mxu0
      %2423 = vmatprep.mubr.f32.mxu0 0.0
      %2424 = vmatmul.mubr.f32.gmra.mrb[0].mxu0 %v2280
      %v2425 = vpop.f32.mrb[0].mxu0
      %v2426 = vadd.f32 %v2327, %v2425
      %v2427 = vpop.f32.mrb[0].mxu0
      %2428 = vmatprep.mubr.f32.mxu0 0.0
      %2429 = vmatmul.mubr.f32.gmra.mrb[0].mxu0 %v2281
      %v2430 = vpop.f32.mrb[0].mxu0
      %v2431 = vadd.f32 %v2327, %v2430
      %v2432 = vpop.f32.mrb[0].mxu0
      %2433 = vmatprep.mubr.f32.mxu0 0.0
      %2434 = vmatmul.mubr.f32.gmra.mrb[0].mxu0 %v2282
      %v2435 = vpop.f32.mrb[0].mxu0
      %v2436 = vadd.f32 %v2327, %v2435
      %v2437 = vpop.f32.mrb[0].mxu0
      %2438 = vmatprep.mubr.f32.mxu0 0.0
      %2439 = vmatmul.mubr.f32.gmra.mrb[0].mxu0 %v2283
      %v2440 = vpop.f32.mrb[0].mxu0
      %v2441 = vadd.f32 %v2327, %v2440
      %v2442 = vpop.f32.mrb[0].mxu0
      %2443 = vmatprep.mubr.f32.mxu0 0.0
      %2444 = vmatmul.mubr.f32.gmra.mrb[0].mxu0 %v2284
      %v2445 = vpop.f32.mrb[0].mxu0
      %v2446 = vadd.f32 %v2327, %v2445
      %v2447 = vpop.f32.mrb[0].mxu0
      %2448 = vmatprep.mubr.f32.mxu0 0.0
      %2449 = vmatmul.mubr.f32.gmra.mrb[0].mxu0 %v2285
      %v2450 = vpop.f32.mrb[0].mxu0
      %v2451 = vadd.f32 %v2327, %v2450
      %v2452 = vpop.f32.mrb[0].mxu0
      %2453 = vmatprep.mubr.f32.mxu0 0.0
      %2454 = vmatmul.mubr.f32.gmra.mrb[0].mxu0 %v2286
      %v2455 = vpop.f32.mrb[0].mxu0
      %v2456 = vadd.f32 %v2327, %v2455
      %v2457 = vpop.f32.mrb[0].mxu0
      %2458 = vmatprep.mubr.f32.mxu0 0.0
      %2459 = vmatmul.mubr.f32.gmra.mrb[0].mxu0 %v2287
      %v2460 = vpop.f32.mrb[0].mxu0
      %v2461 = vadd.f32 %v2327, %v2460
      %v2462 = vpop.f32.mrb[0].mxu0
      %2463 = vmatprep.mubr.f32.mxu0 0.0
      %2464 = vmatmul.mubr.f32.gmra.mrb[0].mxu0 %v2288
      %v2465 = vpop.f32.mrb[0].mxu0
      %v2466 = vadd.f32 %v2327, %v2465
      %v2467 = vpop.f32.mrb[0].mxu0
      %2468 = vmatprep.mubr.f32.mxu0 0.0
      %2469 = vmatmul.mubr.f32.gmra.mrb[0].mxu0 %v2289
      %v2470 = vpop.f32.mrb[0].mxu0
      %v2471 = vadd.f32 %v2327, %v2470
      %v2472 = vpop.f32.mrb[0].mxu0
      %2473 = vmatprep.mubr.f32.mxu0 0.0
      %2474 = vmatmul.mubr.f32.gmra.mrb[0].mxu0 %v2290
      %v2475 = vpop.f32.mrb[0].mxu0
      %v2476 = vadd.f32 %v2327, %v2475
      %v2477 = vpop.f32.mrb[0].mxu0
      %2478 = vmatprep.mubr.f32.mxu0 0.0
      %2479 = vmatmul.mubr.f32.gmra.mrb[0].mxu0 %v2291
      %v2480 = vpop.f32.mrb[0].mxu0
      %v2481 = vadd.f32 %v2327, %v2480
      %v2482 = vpop.f32.mrb[0].mxu0
      %2483 = vmatprep.mubr.f32.mxu0 0.0
      %2484 = vmatmul.mubr.f32.gmra.mrb[0].mxu0 %v2292
      %v2485 = vpop.f32.mrb[0].mxu0
      %v2486 = vadd.f32 %v2327, %v2485
      %v2487 = vpop.f32.mrb[0].mxu0
      %2488 = vmatprep.mubr.f32.mxu0 0.0
      %2489 = vmatmul.mubr.f32.gmra.mrb[0].mxu0 %v2293
      %v2490 = vpop.f32.mrb[0].mxu0
      %v2491 = vadd.f32 %v2327, %v2490
      %v2492 = vpop.f32.mrb[0].mxu0
      %2493 = vmatprep.mubr.f32.mxu0 0.0
      %2494 = vmatmul.mubr.f32.gmra.mrb[0].mxu0 %v2294
      %v2495 = vpop.f32.mrb[0].mxu0
      %v2496 = vadd.f32 %v2327, %v2495
      %v2497 = vpop.f32.mrb[0].mxu0
      %2498 = vmatprep.mubr.f32.mxu0 0.0
      %2499 = vmatmul.mubr.f32.gmra.mrb[0].mxu0 %v2295
      %v2500 = vpop.f32.mrb[0].mxu0
      %v2501 = vadd.f32 %v2327, %v2500
      %v2502 = vpop.f32.mrb[0].mxu0
      %2503 = vmatprep.mubr.f32.mxu0 0.0
      %2504 = vmatmul.mubr.f32.gmra.mrb[0].mxu0 %v2296
      %v2505 = vpop.f32.mrb[0].mxu0
      %v2506 = vadd.f32 %v2327, %v2505
      %v2507 = vpop.f32.mrb[0].mxu0
      %2508 = vmatprep.mubr.f32.mxu0 0.0
      %2509 = vmatmul.mubr.f32.gmra.mrb[0].mxu0 %v2297
      %v2510 = vpop.f32.mrb[0].mxu0
      %v2511 = vadd.f32 %v2327, %v2510
      %v2512 = vpop.f32.mrb[0].mxu0
      %2513 = vmatprep.mubr.f32.mxu0 0.0
      %2514 = vmatmul.mubr.f32.gmra.mrb[0].mxu0 %v2298
      %v2515 = vpop.f32.mrb[0].mxu0
      %v2516 = vadd.f32 %v2327, %v2515
      %v2517 = vpop.f32.mrb[0].mxu0
      %2518 = vmatprep.mubr.f32.mxu0 0.0
      %2519 = vmatmul.mubr.f32.gmra.mrb[0].mxu0 %v2299
      %v2520 = vpop.f32.mrb[0].mxu0
      %v2521 = vadd.f32 %v2327, %v2520
      %v2522 = vpop.f32.mrb[0].mxu0
      %2523 = vmatprep.mubr.f32.mxu0 0.0
      %2524 = vmatmul.mubr.f32.gmra.mrb[0].mxu0 %v2300
      %v2525 = vpop.f32.mrb[0].mxu0
      %v2526 = vadd.f32 %v2327, %v2525
      %v2527 = vpop.f32.mrb[0].mxu0
      %2528 = vmatprep.mubr.f32.mxu0 0.0
      %2529 = vmatmul.mubr.f32.gmra.mrb[0].mxu0 %v2301
      %v2530 = vpop.f32.mrb[0].mxu0
      %v2531 = vadd.f32 %v2327, %v2530
      %v2532 = vpop.f32.mrb[0].mxu0
      %2533 = vmatprep.mubr.f32.mxu0 0.0
      %2534 = vmatmul.mubr.f32.gmra.mrb[0].mxu0 %v2302
      %v2535 = vpop.f32.mrb[0].mxu0
      %v2536 = vadd.f32 %v2327, %v2535
      %v2537 = vpop.f32.mrb[0].mxu0
      %2538 = vmatprep.mubr.f32.mxu0 0.0
      %2539 = vmatmul.mubr.f32.gmra.mrb[0].mxu0 %v2303
      %v2540 = vpop.f32.mrb[0].mxu0
      %v2541 = vadd.f32 %v2327, %v2540
      %v2542 = vpop.f32.mrb[0].mxu0
      %2543 = vmatprep.mubr.f32.mxu0 0.0
      %2544 = vmatmul.mubr.f32.gmra.mrb[0].mxu0 %v2304
      %v2545 = vpop.f32.mrb[0].mxu0
      %v2546 = vadd.f32 %v2327, %v2545
      %v2547 = vpop.f32.mrb[0].mxu0
      %2548 = vmatprep.mubr.f32.mxu0 0.0
      %2549 = vmatmul.mubr.f32.gmra.mrb[0].mxu0 %v2305
      %v2550 = vpop.f32.mrb[0].mxu0
      %v2551 = vadd.f32 %v2327, %v2550
      %v2552 = vpop.f32.mrb[0].mxu0
      %2553 = vdwg.mxu0
      %vm2554 = vcmask 64512
      %2555 = vst.msk [vmem:[%s498] sm:$0xff] %vm2554, %v2396
      %2556 = vst.msk [vmem:[%s498 + $0x8] sm:$0xff] %vm2554, %v2401
      %2557 = vst.msk [vmem:[%s498 + $0x10] sm:$0xff] %vm2554, %v2406
      %2558 = vst.msk [vmem:[%s498 + $0x18] sm:$0xff] %vm2554, %v2411
      %2559 = vst.msk [vmem:[%s498 + $0x20] sm:$0xff] %vm2554, %v2416
      %2560 = vst.msk [vmem:[%s498 + $0x28] sm:$0xff] %vm2554, %v2421
      %2561 = vst.msk [vmem:[%s498 + $0x30] sm:$0xff] %vm2554, %v2426
      %2562 = vst.msk [vmem:[%s498 + $0x38] sm:$0xff] %vm2554, %v2431
      %2563 = vst.msk [vmem:[%s498 + $0x40] sm:$0xff] %vm2554, %v2436
      %2564 = vst.msk [vmem:[%s498 + $0x48] sm:$0xff] %vm2554, %v2441
      %2565 = vst.msk [vmem:[%s498 + $0x50] sm:$0xff] %vm2554, %v2446
      %2566 = vst.msk [vmem:[%s498 + $0x58] sm:$0xff] %vm2554, %v2451
      %2567 = vst.msk [vmem:[%s498 + $0x60] sm:$0xff] %vm2554, %v2456
      %2568 = vst.msk [vmem:[%s498 + $0x68] sm:$0xff] %vm2554, %v2461
      %2569 = vst.msk [vmem:[%s498 + $0x70] sm:$0xff] %vm2554, %v2466
      %2570 = vst.msk [vmem:[%s498 + $0x78] sm:$0xff] %vm2554, %v2471
      %2571 = vst.msk [vmem:[%s498 + $0x80] sm:$0xff] %vm2554, %v2476
      %2572 = vst.msk [vmem:[%s498 + $0x88] sm:$0xff] %vm2554, %v2481
      %2573 = vst.msk [vmem:[%s498 + $0x90] sm:$0xff] %vm2554, %v2486
      %2574 = vst.msk [vmem:[%s498 + $0x98] sm:$0xff] %vm2554, %v2491
      %2575 = vst.msk [vmem:[%s498 + $0xa0] sm:$0xff] %vm2554, %v2496
      %2576 = vst.msk [vmem:[%s498 + $0xa8] sm:$0xff] %vm2554, %v2501
      %2577 = vst.msk [vmem:[%s498 + $0xb0] sm:$0xff] %vm2554, %v2506
      %2578 = vst.msk [vmem:[%s498 + $0xb8] sm:$0xff] %vm2554, %v2511
      %2579 = vst.msk [vmem:[%s498 + $0xc0] sm:$0xff] %vm2554, %v2516
      %2580 = vst.msk [vmem:[%s498 + $0xc8] sm:$0xff] %vm2554, %v2521
      %2581 = vst.msk [vmem:[%s498 + $0xd0] sm:$0xff] %vm2554, %v2526
      %2582 = vst.msk [vmem:[%s498 + $0xd8] sm:$0xff] %vm2554, %v2531
      %2583 = vst.msk [vmem:[%s498 + $0xe0] sm:$0xff] %vm2554, %v2536
      %2584 = vst.msk [vmem:[%s498 + $0xe8] sm:$0xff] %vm2554, %v2541
      %2585 = vst.msk [vmem:[%s498 + $0xf0] sm:$0xff] %vm2554, %v2546
      %2586 = vst.msk [vmem:[%s498 + $0xf8] sm:$0xff] %vm2554, %v2551
      %s2587 = smul.u32 32, %s25
      %p2588 = scmp.lt.s32.totalorder %s24, 1
      %s2589 = scalar_select %p2588, %s24, 1
      %p2590 = scmp.lt.s32.totalorder %s2587, 31
      %s2591 = scalar_select %p2590, %s2587, 31
      %s2592 = smul.addr %s2589, 32
      %s2593 = sadd.s32 %s2591, %s2592
      %s2594 = smul.addr %s2593, 8
      %s2595 = scalar_lea.vmem %s9, %s2594
      // Predicated region
      $region57: #{tpu_custom_call.1} parent=55 // pred_check
        %p2596 = pneg %p278
      $region58: #{tpu_custom_call.1} parent=55 // pred_check_branch
        %2598 = sbr.rel (%p2596) target = $region60
      $region59: #{tpu_custom_call.1} parent=55 // pred_region
        %s2599 = smul.u32 32, %s25
      $region60: #{tpu_custom_call.1} parent=55 // pred_fallthru
        _
    $region56: #{tpu_custom_call.1} parent=5 // pred_fallthru
      _
    %p2600 = scmp.le.s32.totalorder 2, %s15
    // Predicated region
    $region61: #{tpu_custom_call.1} parent=5 // pred_check
      %p2601 = pneg %p2600
    $region62: #{tpu_custom_call.1} parent=5 // pred_check_branch
      %2603 = sbr.rel (%p2601) target = $region64
    $region63: #{tpu_custom_call.1} parent=5 // pred_region
      %s2604 = ssub.s32 %s15, 2
      // Predicated region
      $region65: #{tpu_custom_call.1} parent=63 // pred_check
        %p2605 = pneg %p284
      $region66: #{tpu_custom_call.1} parent=63 // pred_check_branch
        %2607 = sbr.rel (%p2605) target = $region68
      $region67: #{tpu_custom_call.1} parent=63 // pred_region
        %s2608 = smul.u32 32, %s27
        %p2609 = scmp.lt.s32.totalorder %s26, 1
        %s2610 = scalar_select %p2609, %s26, 1
        %p2611 = scmp.lt.s32.totalorder %s2608, 31
        %s2612 = scalar_select %p2611, %s2608, 31
        %s2613 = smul.addr %s2610, 32
        %s2614 = sadd.s32 %s2612, %s2613
        %s2615 = smul.addr %s2614, 8
        %s2616 = scalar_lea.vmem %s9, %s2615
      $region68: #{tpu_custom_call.1} parent=63 // pred_fallthru
        _
    $region64: #{tpu_custom_call.1} parent=5 // pred_fallthru
      _
  $region6: #{tpu_custom_call.1} parent=0 // loop_footer
    %s19 = sadd.s32 1, %s15
  $region7: #{tpu_custom_call.1} parent=0 // loop_footer_branch
    %14 = sbr.rel target = $region3
  $region8: #{tpu_custom_call.1} parent=0 // loop_exit
    _

</llo_original>
